<compile_context>
chip_gen: v7x
topology: tpu7x:2x2x1
jax: 0.10.0
libtpu: 0.0.40
codegen_flags: <defaults>
</compile_context>

<pallas_src>
import jax
import jax.numpy as jnp
import numpy as np
from jax import lax
from jax.experimental import pallas as pl
from jax.experimental.pallas import tpu as pltpu

H = W = 4   # spatial size implied by Linear(8, 8) = 2 * (H/2) * (W/2)
PK = 8      # samples packed per lane-row
_PREC = lax.Precision.HIGHEST


def _cdiv(a, b):
    return (a + b - 1) // b


def _round_up(a, b):
    return _cdiv(a, b) * b


def dqn_kernel(x_ref, m0_ref, m1_ref, bc_ref, w2_ref, b2_ref, w3_ref, b3_ref, out_ref):
    # x_ref : (tbp, 128)  8 packed samples per row, lanes s*16 + (i*4 + j)
    # m0/m1 : (128, 128)  conv-as-matmul for pool-window rows kh=0 / kh=1;
    #                     columns kw*64 + s*8 + f, f = c*4 + oh*2 + ow (NCHW flatten)
    # bc_ref: (1, 64)     conv bias on pooled lane order s*8 + f
    # w2_ref: (64, 64)    block-diag of layer2.weight.T (per-sample)
    # b2_ref: (1, 64)
    # w3_ref: (64, 8*A), b3_ref: (1, 8*A)
    # out_ref: (tbp, 8*A) lane s*A + a  (row-major identical to (tbp*8, A))
    x = x_ref[...]

    # conv(3x3, pad=1) for both kh window rows; one full-K, 128-lane push each.
    h0 = jnp.dot(x, m0_ref[...], preferred_element_type=jnp.float32, precision=_PREC)
    h1 = jnp.dot(x, m1_ref[...], preferred_element_type=jnp.float32, precision=_PREC)

    # 2x2 max-pool: kh reduction is a whole-vreg max, kw reduction one 64-lane slice.
    t = jnp.maximum(h0, h1)                               # (tbp, 128)
    t = jnp.maximum(t[:, 0:64], t[:, 64:128])             # (tbp, 64)
    # bias + ReLU after the max (bias is window-independent, relu/max commute).
    pooled = jnp.maximum(t + bc_ref[...], 0.0)            # (tbp, 64)

    # layer2 + ReLU (block-diagonal per-sample matmul).
    y2 = jnp.dot(pooled, w2_ref[...], preferred_element_type=jnp.float32,
                 precision=_PREC) + b2_ref[...]
    y2 = jnp.maximum(y2, 0.0)

    # layer3
    out_ref[...] = (
        jnp.dot(y2, w3_ref[...], preferred_element_type=jnp.float32,
                precision=_PREC) + b3_ref[...]
    ).astype(out_ref.dtype)


def init_params(key, n_actions):
    ks = jax.random.split(key, 6)

    def u(k, shape, fan_in):
        bound = 1.0 / jnp.sqrt(jnp.float32(fan_in))
        return jax.random.uniform(k, shape, jnp.float32, -bound, bound)

    return dict(
        conv_w=u(ks[0], (2, 1, 3, 3), 9),       # Conv2d(1, 2, 3) weight (O, I, kh, kw)
        conv_b=u(ks[1], (2,), 9),
        w2=u(ks[2], (8, 8), 8),                  # Linear(8, 8) weight (out, in)
        b2=u(ks[3], (8,), 8),
        w3=u(ks[4], (n_actions, 8), 8),          # Linear(8, n_actions)
        b3=u(ks[5], (n_actions,), 8),
    )


def _pack_conv(conv_w, conv_b):
    """Fold Conv2d(1,2,3,pad=1) on 4x4 inputs, 8 samples packed per row, into two
    block-diagonal (128, 128) matrices (one per pool-window row kh).

    Row   r = s*16 + pi*4 + pj      (sample s, input pixel (pi, pj))
    Col   o = kw*64 + s*8 + f       (f = c*4 + oh*2 + ow, NCHW flatten order)
    conv output position (i, j) = (2*oh + kh, 2*ow + kw).
    """
    assert tuple(conv_w.shape) == (2, 1, 3, 3) and tuple(conv_b.shape) == (2,)
    idx_c = np.zeros((2, 128, 128), np.int32)
    idx_di = np.zeros((2, 128, 128), np.int32)
    idx_dj = np.zeros((2, 128, 128), np.int32)
    mask = np.zeros((2, 128, 128), np.float32)
    for s in range(PK):
        for c in range(2):
            for oh in range(2):
                for ow in range(2):
                    f = c * 4 + oh * 2 + ow
                    for kh in range(2):
                        for kw in range(2):
                            i, j = 2 * oh + kh, 2 * ow + kw
                            col = kw * 64 + s * 8 + f
                            for di in range(3):
                                for dj in range(3):
                                    pi, pj = i + di - 1, j + dj - 1
                                    if 0 <= pi < 4 and 0 <= pj < 4:
                                        row = s * 16 + pi * 4 + pj
                                        idx_c[kh, row, col] = c
                                        idx_di[kh, row, col] = di
                                        idx_dj[kh, row, col] = dj
                                        mask[kh, row, col] = 1.0
    w_sq = conv_w[:, 0]                                    # (2, 3, 3)
    M = w_sq[idx_c, idx_di, idx_dj] * mask                 # (2, 128, 128)
    bias_cols = np.array([c for _s in range(PK) for c in range(2) for _p in range(4)],
                         np.int32)                         # lane s*8 + c*4 + ss -> c
    bc = conv_b[bias_cols].reshape(1, 64)
    return M[0], M[1], bc


def dqn_forward(x, params, *, tb=4096):
    """x: (B, H, W) float32 -> (B, n_actions) float32."""
    B = x.shape[0]
    assert x.shape[1:] == (H, W)
    n_actions = params["w3"].shape[0]
    assert params["w2"].shape == (8, 8) and params["w3"].shape == (n_actions, 8)

    # ---- host-side weight packing (tiny, done once per call) ----
    m0, m1, bc = _pack_conv(params["conv_w"], params["conv_b"])
    eye8 = jnp.eye(PK, dtype=jnp.float32)
    w2b = jnp.kron(eye8, params["w2"].T)                     # (64, 64) block-diagonal
    b2b = jnp.tile(params["b2"], PK).reshape(1, PK * 8)
    w3b = jnp.kron(eye8, params["w3"].T)                     # (64, 8*A) block-diagonal
    b3b = jnp.tile(params["b3"], PK).reshape(1, PK * n_actions)

    # ---- batch tiling: tbp packed rows (= tbp*8 samples) per grid step ----
    rows_packed = _cdiv(B, PK)
    tbp = max(8, tb // PK)
    tbp = min(tbp, _round_up(_cdiv(rows_packed, 2), 8))      # v7x: allow >=2 grid steps
    tbp = _round_up(max(tbp, 8), 8)                          # sublane multiple of 8
    grid_b = _cdiv(rows_packed, tbp)
    padded_packed = grid_b * tbp
    b_pad = padded_packed * PK

    x_flat = jnp.pad(x.reshape(B, H * W).astype(jnp.float32),
                     ((0, b_pad - B), (0, 0)))
    x_packed = x_flat.reshape(padded_packed, PK * H * W)     # (rows, 128), lane-dense

    def const_spec(a):  # weights: constant block index -> VMEM-resident, no re-DMA
        return pl.BlockSpec(a.shape, lambda i: (0, 0))

    out = pl.pallas_call(
        dqn_kernel,
        out_shape=jax.ShapeDtypeStruct((padded_packed, PK * n_actions), jnp.float32),
        grid=(grid_b,),
        in_specs=[
            pl.BlockSpec((tbp, PK * H * W), lambda i: (i, 0)),
            const_spec(m0), const_spec(m1), const_spec(bc),
            const_spec(w2b), const_spec(b2b),
            const_spec(w3b), const_spec(b3b),
        ],
        out_specs=pl.BlockSpec((tbp, PK * n_actions), lambda i: (i, 0)),
        compiler_params=pltpu.CompilerParams(dimension_semantics=("parallel",)),
    )(x_packed, m0, m1, bc, w2b, b2b, w3b, b3b)

    # (rows, 8*A) row-major is identical memory to (rows*8, A): reshape is free.
    return out.reshape(b_pad, n_actions)[:B]


def dqn_reference(x, params):
    """Plain-JAX reference replicating the PyTorch forward exactly."""
    B = x.shape[0]
    xi = x[:, None, :, :].astype(jnp.float32)  # NCHW
    conv = lax.conv_general_dilated(
        xi, params["conv_w"], window_strides=(1, 1), padding=((1, 1), (1, 1)),
        dimension_numbers=("NCHW", "OIHW", "NCHW"), precision=_PREC,
    ) + params["conv_b"].reshape(1, 2, 1, 1)
    r = jnp.maximum(conv, 0.0)
    pooled = r.reshape(B, 2, 2, 2, 2, 2).max(axis=(3, 5))    # (B, C, 2, 2)
    flat = pooled.reshape(B, 8)                               # NCHW flatten
    y2 = jnp.maximum(
        jnp.dot(flat, params["w2"].T, precision=_PREC) + params["b2"], 0.0)
    return jnp.dot(y2, params["w3"].T, precision=_PREC) + params["b3"]


if __name__ == "__main__":
    key = jax.random.PRNGKey(0)
    kp, kx = jax.random.split(key)
    B, n_actions = 2, 4
    params = init_params(kp, n_actions)
    x = jax.random.normal(kx, (B, H, W), jnp.float32)

    out = jax.block_until_ready(dqn_forward(x, params))
    ref = dqn_reference(x, params)

    assert out.shape == (B, n_actions) and out.dtype == jnp.float32
    if not jnp.allclose(out, ref, atol=1e-5, rtol=1e-5):
        raise SystemExit(f"MISMATCH\nkernel={out}\nref={ref}")
    print("KERNEL_OK")
</pallas_src>

<mosaic_0001>
module attributes {stable_mosaic.version = 11 : i64} {
  func.func @dqn_kernel(%arg0: i32, %arg1: memref<8x128xf32, #tpu.memory_space<vmem>>, %arg2: memref<128x128xf32, #tpu.memory_space<vmem>>, %arg3: memref<128x128xf32, #tpu.memory_space<vmem>>, %arg4: memref<1x64xf32, #tpu.memory_space<vmem>>, %arg5: memref<64x64xf32, #tpu.memory_space<vmem>>, %arg6: memref<1x64xf32, #tpu.memory_space<vmem>>, %arg7: memref<64x32xf32, #tpu.memory_space<vmem>>, %arg8: memref<1x32xf32, #tpu.memory_space<vmem>>, %arg9: memref<8x32xf32, #tpu.memory_space<vmem>>) attributes {dimension_semantics = [#tpu.dimension_semantics<parallel>], iteration_bounds = array<i64: 1>, scalar_prefetch = 0 : i64, scratch_operands = 0 : i64, tpu.core_type = #tpu.core_type<tc>, window_params = [{transform_indices = @transform_0, window_bounds = array<i64: 8, 128>}, {pipeline_mode = #tpu.pipeline_mode<synchronous>, transform_indices = @transform_1, window_bounds = array<i64: 128, 128>}, {pipeline_mode = #tpu.pipeline_mode<synchronous>, transform_indices = @transform_2, window_bounds = array<i64: 128, 128>}, {pipeline_mode = #tpu.pipeline_mode<synchronous>, transform_indices = @transform_3, window_bounds = array<i64: 1, 64>}, {pipeline_mode = #tpu.pipeline_mode<synchronous>, transform_indices = @transform_4, window_bounds = array<i64: 64, 64>}, {pipeline_mode = #tpu.pipeline_mode<synchronous>, transform_indices = @transform_5, window_bounds = array<i64: 1, 64>}, {pipeline_mode = #tpu.pipeline_mode<synchronous>, transform_indices = @transform_6, window_bounds = array<i64: 64, 32>}, {pipeline_mode = #tpu.pipeline_mode<synchronous>, transform_indices = @transform_7, window_bounds = array<i64: 1, 32>}, {transform_indices = @transform_8, window_bounds = array<i64: 8, 32>}]} {
    %c0 = arith.constant 0 : index
    %c0_0 = arith.constant 0 : index
    %0 = vector.load %arg1[%c0, %c0_0] : memref<8x128xf32, #tpu.memory_space<vmem>>, vector<8x128xf32>
    %c0_1 = arith.constant 0 : index
    %c0_2 = arith.constant 0 : index
    %1 = vector.load %arg2[%c0_1, %c0_2] : memref<128x128xf32, #tpu.memory_space<vmem>>, vector<128x128xf32>
    %cst = arith.constant dense<0.000000e+00> : vector<8x128xf32>
    %2 = tpu.matmul %0, %1, %cst {dimension_numbers = #tpu.dot_dimension_numbers<[1], [0], [0], [1], [0, 0, 1, 1], [], []>, precision = #tpu.contract_precision<fp32>} : vector<8x128xf32>, vector<128x128xf32>, vector<8x128xf32> -> vector<8x128xf32>
    %c0_3 = arith.constant 0 : index
    %c0_4 = arith.constant 0 : index
    %3 = vector.load %arg3[%c0_3, %c0_4] : memref<128x128xf32, #tpu.memory_space<vmem>>, vector<128x128xf32>
    %cst_5 = arith.constant dense<0.000000e+00> : vector<8x128xf32>
    %4 = tpu.matmul %0, %3, %cst_5 {dimension_numbers = #tpu.dot_dimension_numbers<[1], [0], [0], [1], [0, 0, 1, 1], [], []>, precision = #tpu.contract_precision<fp32>} : vector<8x128xf32>, vector<128x128xf32>, vector<8x128xf32> -> vector<8x128xf32>
    %5 = arith.maximumf %2, %4 : vector<8x128xf32>
    %6 = vector.extract_strided_slice %5 {offsets = [0, 0], sizes = [8, 64], strides = [1, 1]} : vector<8x128xf32> to vector<8x64xf32>
    %7 = vector.extract_strided_slice %5 {offsets = [0, 64], sizes = [8, 64], strides = [1, 1]} : vector<8x128xf32> to vector<8x64xf32>
    %8 = arith.maximumf %6, %7 : vector<8x64xf32>
    %c0_6 = arith.constant 0 : index
    %c0_7 = arith.constant 0 : index
    %9 = vector.load %arg4[%c0_6, %c0_7] : memref<1x64xf32, #tpu.memory_space<vmem>>, vector<1x64xf32>
    %10 = vector.broadcast %9 : vector<1x64xf32> to vector<8x64xf32>
    %11 = arith.addf %8, %10 : vector<8x64xf32>
    %cst_8 = arith.constant 0.000000e+00 : f32
    %12 = vector.broadcast %cst_8 : f32 to vector<8x64xf32>
    %13 = arith.maximumf %11, %12 : vector<8x64xf32>
    %c0_9 = arith.constant 0 : index
    %c0_10 = arith.constant 0 : index
    %14 = vector.load %arg5[%c0_9, %c0_10] : memref<64x64xf32, #tpu.memory_space<vmem>>, vector<64x64xf32>
    %cst_11 = arith.constant dense<0.000000e+00> : vector<8x64xf32>
    %15 = tpu.matmul %13, %14, %cst_11 {dimension_numbers = #tpu.dot_dimension_numbers<[1], [0], [0], [1], [0, 0, 1, 1], [], []>, precision = #tpu.contract_precision<fp32>} : vector<8x64xf32>, vector<64x64xf32>, vector<8x64xf32> -> vector<8x64xf32>
    %c0_12 = arith.constant 0 : index
    %c0_13 = arith.constant 0 : index
    %16 = vector.load %arg6[%c0_12, %c0_13] : memref<1x64xf32, #tpu.memory_space<vmem>>, vector<1x64xf32>
    %17 = vector.broadcast %16 : vector<1x64xf32> to vector<8x64xf32>
    %18 = arith.addf %15, %17 : vector<8x64xf32>
    %cst_14 = arith.constant 0.000000e+00 : f32
    %19 = vector.broadcast %cst_14 : f32 to vector<8x64xf32>
    %20 = arith.maximumf %18, %19 : vector<8x64xf32>
    %c0_15 = arith.constant 0 : index
    %c0_16 = arith.constant 0 : index
    %21 = vector.load %arg7[%c0_15, %c0_16] : memref<64x32xf32, #tpu.memory_space<vmem>>, vector<64x32xf32>
    %cst_17 = arith.constant dense<0.000000e+00> : vector<8x32xf32>
    %22 = tpu.matmul %20, %21, %cst_17 {dimension_numbers = #tpu.dot_dimension_numbers<[1], [0], [0], [1], [0, 0, 1, 1], [], []>, precision = #tpu.contract_precision<fp32>} : vector<8x64xf32>, vector<64x32xf32>, vector<8x32xf32> -> vector<8x32xf32>
    %c0_18 = arith.constant 0 : index
    %c0_19 = arith.constant 0 : index
    %23 = vector.load %arg8[%c0_18, %c0_19] : memref<1x32xf32, #tpu.memory_space<vmem>>, vector<1x32xf32>
    %24 = vector.broadcast %23 : vector<1x32xf32> to vector<8x32xf32>
    %25 = arith.addf %22, %24 : vector<8x32xf32>
    %c0_20 = arith.constant 0 : index
    %c0_21 = arith.constant 0 : index
    %26 = vector.load %arg9[%c0_20, %c0_21] : memref<8x32xf32, #tpu.memory_space<vmem>>, vector<8x32xf32>
    tpu.vector_store %arg9[%c0_20, %c0_21], %25 {strides = array<i32>} : memref<8x32xf32, #tpu.memory_space<vmem>>, vector<8x32xf32>,
    return
  }
  func.func @transform_0(%arg0: i32) -> (i32, i32) {
    %c0_i32 = arith.constant 0 : i32
    %c0_i32_0 = arith.constant 0 : i32
    return %arg0, %c0_i32 : i32, i32
  }
  func.func @transform_1(%arg0: i32) -> (i32, i32) {
    %c0_i32 = arith.constant 0 : i32
    %c0_i32_0 = arith.constant 0 : i32
    %c0_i32_1 = arith.constant 0 : i32
    return %c0_i32, %c0_i32_0 : i32, i32
  }
  func.func @transform_2(%arg0: i32) -> (i32, i32) {
    %c0_i32 = arith.constant 0 : i32
    %c0_i32_0 = arith.constant 0 : i32
    %c0_i32_1 = arith.constant 0 : i32
    return %c0_i32, %c0_i32_0 : i32, i32
  }
  func.func @transform_3(%arg0: i32) -> (i32, i32) {
    %c0_i32 = arith.constant 0 : i32
    %c0_i32_0 = arith.constant 0 : i32
    %c0_i32_1 = arith.constant 0 : i32
    return %c0_i32, %c0_i32_0 : i32, i32
  }
  func.func @transform_4(%arg0: i32) -> (i32, i32) {
    %c0_i32 = arith.constant 0 : i32
    %c0_i32_0 = arith.constant 0 : i32
    %c0_i32_1 = arith.constant 0 : i32
    return %c0_i32, %c0_i32_0 : i32, i32
  }
  func.func @transform_5(%arg0: i32) -> (i32, i32) {
    %c0_i32 = arith.constant 0 : i32
    %c0_i32_0 = arith.constant 0 : i32
    %c0_i32_1 = arith.constant 0 : i32
    return %c0_i32, %c0_i32_0 : i32, i32
  }
  func.func @transform_6(%arg0: i32) -> (i32, i32) {
    %c0_i32 = arith.constant 0 : i32
    %c0_i32_0 = arith.constant 0 : i32
    %c0_i32_1 = arith.constant 0 : i32
    return %c0_i32, %c0_i32_0 : i32, i32
  }
  func.func @transform_7(%arg0: i32) -> (i32, i32) {
    %c0_i32 = arith.constant 0 : i32
    %c0_i32_0 = arith.constant 0 : i32
    %c0_i32_1 = arith.constant 0 : i32
    return %c0_i32, %c0_i32_0 : i32, i32
  }
  func.func @transform_8(%arg0: i32) -> (i32, i32) {
    %c0_i32 = arith.constant 0 : i32
    %c0_i32_0 = arith.constant 0 : i32
    return %arg0, %c0_i32 : i32, i32
  }
}

</mosaic_0001>

<llo_original>
// kernel: tpu_custom_call.1
$region0: #{tpu_custom_call.1}
  #allocation0 [shape = 'u32[]', space=smem, size = 0x4, offset = 0x4, fixed_abs, tag = 'smem constant byte address 0x4 - core index']
  #allocation1 [shape = 'u32[144,128]{1,0:T(1,128)}', space=vmem, size = 0x12000, scoped, tag = 'internal scratch']
  %s0 = inlined_call_operand.vmem [shape: f32[8,128], index: 0, kind: input, shape index: {}]
  %s1 = inlined_call_operand.hbm [shape: f32[128,128], index: 1, kind: input, shape index: {}]
  %s2 = inlined_call_operand.hbm [shape: f32[128,128], index: 2, kind: input, shape index: {}]
  %s3 = inlined_call_operand.vmem [shape: f32[1,64], index: 3, kind: input, shape index: {}]
  %s4 = inlined_call_operand.vmem [shape: f32[64,64], index: 4, kind: input, shape index: {}]
  %s5 = inlined_call_operand.vmem [shape: f32[1,64], index: 5, kind: input, shape index: {}]
  %s6 = inlined_call_operand.vmem [shape: f32[64,32], index: 6, kind: input, shape index: {}]
  %s7 = inlined_call_operand.vmem [shape: f32[1,32], index: 7, kind: input, shape index: {}]
  %s8 = inlined_call_operand.hbm [shape: f32[8,32], index: 8, kind: output, shape index: {}]
  %s9 = sld [smem:[#allocation0]]
  $region50: #{tpu_custom_call.1} parent=0
    _
  %s11 = ssub.s32 1, %s9
  %s12 = scalar_select 0, %s11, %s9
  $region1: #{tpu_custom_call.1} parent=0
    #allocation2 [shape = 'u8[65536]{0}', space=vmem, size = 0x10000, scoped, tag = 'input window, operand 1, single buffered']
    #allocation3 [shape = 's32[1]{0}', space=sflag, size = 0x4, scoped, tag = 'scoped memory for tpu_custom_call.1']
    #allocation4 [shape = 's32[1]{0}', space=sflag, size = 0x4, scoped, tag = 'scoped memory for tpu_custom_call.1']
    #allocation5 [shape = 'u8[65536]{0}', space=vmem, size = 0x10000, scoped, tag = 'input window, operand 2, single buffered']
    #allocation6 [shape = 's32[1]{0}', space=sflag, size = 0x4, scoped, tag = 'scoped memory for tpu_custom_call.1']
    #allocation7 [shape = 'u8[4096]{0}', space=vmem, size = 0x1000, scoped, tag = 'output window, operand 0, single buffered']
    %13 = vsyncpa [#allocation3], 0
    %14 = vsyncpa [#allocation6], 0
    %15 = vsyncpa [#allocation4], 0
    // Predicated region
    $region2: #{tpu_custom_call.1} parent=1 // pred_check
      _
    $region3: #{tpu_custom_call.1} parent=1 // pred_check_branch
      %17 = sbr.rel (0) target = $region5
    $region4: #{tpu_custom_call.1} parent=1 // pred_region
      _
    $region5: #{tpu_custom_call.1} parent=1 // pred_fallthru
      _
    // Predicated region
    $region6: #{tpu_custom_call.1} parent=1 // pred_check
      _
    $region7: #{tpu_custom_call.1} parent=1 // pred_check_branch
      %19 = sbr.rel (0) target = $region9
    $region8: #{tpu_custom_call.1} parent=1 // pred_region
      %s21 = ssub.s32 2048, 2048
      %22 = vsyncadd [#allocation3], %s21
      %s23 = sshll.u32 [#allocation2], 4
      %s24 = int_to_ptr.vmem [resolvable:$true] %s23
      %29 = dma.hbm_to_vmem [thread:$0]  %s1, 2048, %s24, [#allocation3], 128, 128, 8
    $region9: #{tpu_custom_call.1} parent=1 // pred_fallthru
      _
    // Predicated region
    $region10: #{tpu_custom_call.1} parent=1 // pred_check
      _
    $region11: #{tpu_custom_call.1} parent=1 // pred_check_branch
      %31 = sbr.rel (0) target = $region13
    $region12: #{tpu_custom_call.1} parent=1 // pred_region
      %s33 = ssub.s32 2048, 2048
      %34 = vsyncadd [#allocation6], %s33
      %s35 = sshll.u32 [#allocation5], 4
      %s36 = int_to_ptr.vmem [resolvable:$true] %s35
      %41 = dma.hbm_to_vmem [thread:$0]  %s2, 2048, %s36, [#allocation6], 128, 128, 8
    $region13: #{tpu_custom_call.1} parent=1 // pred_fallthru
      _
    // Predicated region
    $region14: #{tpu_custom_call.1} parent=1 // pred_check
      _
    $region15: #{tpu_custom_call.1} parent=1 // pred_check_branch
      %43 = sbr.rel (0) target = $region17
    $region16: #{tpu_custom_call.1} parent=1 // pred_region
      _
    $region17: #{tpu_custom_call.1} parent=1 // pred_fallthru
      _
    // Predicated region
    $region18: #{tpu_custom_call.1} parent=1 // pred_check
      _
    $region19: #{tpu_custom_call.1} parent=1 // pred_check_branch
      %45 = sbr.rel (0) target = $region21
    $region20: #{tpu_custom_call.1} parent=1 // pred_region
      _
    $region21: #{tpu_custom_call.1} parent=1 // pred_fallthru
      _
    // Predicated region
    $region22: #{tpu_custom_call.1} parent=1 // pred_check
      _
    $region23: #{tpu_custom_call.1} parent=1 // pred_check_branch
      %47 = sbr.rel (0) target = $region25
    $region24: #{tpu_custom_call.1} parent=1 // pred_region
      _
    $region25: #{tpu_custom_call.1} parent=1 // pred_fallthru
      _
    // Predicated region
    $region26: #{tpu_custom_call.1} parent=1 // pred_check
      _
    $region27: #{tpu_custom_call.1} parent=1 // pred_check_branch
      %49 = sbr.rel (0) target = $region29
    $region28: #{tpu_custom_call.1} parent=1 // pred_region
      _
    $region29: #{tpu_custom_call.1} parent=1 // pred_fallthru
      _
    // Predicated region
    $region30: #{tpu_custom_call.1} parent=1 // pred_check
      _
    $region31: #{tpu_custom_call.1} parent=1 // pred_check_branch
      %51 = sbr.rel (0) target = $region33
    $region32: #{tpu_custom_call.1} parent=1 // pred_region
      _
    $region33: #{tpu_custom_call.1} parent=1 // pred_fallthru
      _
    // Predicated region
    $region34: #{tpu_custom_call.1} parent=1 // pred_check
      _
    $region35: #{tpu_custom_call.1} parent=1 // pred_check_branch
      %53 = sbr.rel (0) target = $region37
    $region36: #{tpu_custom_call.1} parent=1 // pred_region
      %54 = dma.done [#allocation3], 2048
    $region37: #{tpu_custom_call.1} parent=1 // pred_fallthru
      _
    // Predicated region
    $region38: #{tpu_custom_call.1} parent=1 // pred_check
      _
    $region39: #{tpu_custom_call.1} parent=1 // pred_check_branch
      %56 = sbr.rel (0) target = $region41
    $region40: #{tpu_custom_call.1} parent=1 // pred_region
      %57 = dma.done [#allocation6], 2048
    $region41: #{tpu_custom_call.1} parent=1 // pred_fallthru
      _
    %v58 = vld [vmem:[%s0] sm:$0xff]
    %v59 = vld [vmem:[#allocation2] sm:$0xff]
    %v60 = vld [vmem:[#allocation2 + $0x8] sm:$0xff]
    %v61 = vld [vmem:[#allocation2 + $0x10] sm:$0xff]
    %v62 = vld [vmem:[#allocation2 + $0x18] sm:$0xff]
    %v63 = vld [vmem:[#allocation2 + $0x20] sm:$0xff]
    %v64 = vld [vmem:[#allocation2 + $0x28] sm:$0xff]
    %v65 = vld [vmem:[#allocation2 + $0x30] sm:$0xff]
    %v66 = vld [vmem:[#allocation2 + $0x38] sm:$0xff]
    %v67 = vld [vmem:[#allocation2 + $0x40] sm:$0xff]
    %v68 = vld [vmem:[#allocation2 + $0x48] sm:$0xff]
    %v69 = vld [vmem:[#allocation2 + $0x50] sm:$0xff]
    %v70 = vld [vmem:[#allocation2 + $0x58] sm:$0xff]
    %v71 = vld [vmem:[#allocation2 + $0x60] sm:$0xff]
    %v72 = vld [vmem:[#allocation2 + $0x68] sm:$0xff]
    %v73 = vld [vmem:[#allocation2 + $0x70] sm:$0xff]
    %v74 = vld [vmem:[#allocation2 + $0x78] sm:$0xff]
    %75 = vmatprep.subr.mxu0 0.0
    %v76 = vand.u32 %v59, 4294901760
    %77 = vmatpush1.msra.mxu0 %v76
    %78 = vmatprep.subr.mxu0 0.0
    %v79 = vand.u32 %v60, 4294901760
    %80 = vmatpush1.msra.mxu0 %v79
    %81 = vmatprep.subr.mxu0 0.0
    %v82 = vand.u32 %v61, 4294901760
    %83 = vmatpush1.msra.mxu0 %v82
    %84 = vmatprep.subr.mxu0 0.0
    %v85 = vand.u32 %v62, 4294901760
    %86 = vmatpush1.msra.mxu0 %v85
    %87 = vmatprep.subr.mxu0 0.0
    %v88 = vand.u32 %v63, 4294901760
    %89 = vmatpush1.msra.mxu0 %v88
    %90 = vmatprep.subr.mxu0 0.0
    %v91 = vand.u32 %v64, 4294901760
    %92 = vmatpush1.msra.mxu0 %v91
    %93 = vmatprep.subr.mxu0 0.0
    %v94 = vand.u32 %v65, 4294901760
    %95 = vmatpush1.msra.mxu0 %v94
    %96 = vmatprep.subr.mxu0 0.0
    %v97 = vand.u32 %v66, 4294901760
    %98 = vmatpush1.msra.mxu0 %v97
    %99 = vmatprep.subr.mxu0 0.0
    %v100 = vand.u32 %v67, 4294901760
    %101 = vmatpush1.msra.mxu0 %v100
    %102 = vmatprep.subr.mxu0 0.0
    %v103 = vand.u32 %v68, 4294901760
    %104 = vmatpush1.msra.mxu0 %v103
    %105 = vmatprep.subr.mxu0 0.0
    %v106 = vand.u32 %v69, 4294901760
    %107 = vmatpush1.msra.mxu0 %v106
    %108 = vmatprep.subr.mxu0 0.0
    %v109 = vand.u32 %v70, 4294901760
    %110 = vmatpush1.msra.mxu0 %v109
    %111 = vmatprep.subr.mxu0 0.0
    %v112 = vand.u32 %v71, 4294901760
    %113 = vmatpush1.msra.mxu0 %v112
    %114 = vmatprep.subr.mxu0 0.0
    %v115 = vand.u32 %v72, 4294901760
    %116 = vmatpush1.msra.mxu0 %v115
    %117 = vmatprep.subr.mxu0 0.0
    %v118 = vand.u32 %v73, 4294901760
    %119 = vmatpush1.msra.mxu0 %v118
    %120 = vmatprep.subr.mxu0 0.0
    %v121 = vand.u32 %v74, 4294901760
    %122 = vmatpush1.msra.mxu0 %v121
    %123 = vmatprep.subr.mxu0 0.0
    %124 = vmatpush1.msra.mxu0 0.0
    %125 = vmatprep.subr.mxu0 0.0
    %126 = vmatpush1.msra.mxu0 0.0
    %127 = vmatprep.subr.mxu0 0.0
    %128 = vmatpush1.msra.mxu0 0.0
    %129 = vmatprep.subr.mxu0 0.0
    %130 = vmatpush1.msra.mxu0 0.0
    %131 = vmatprep.subr.mxu0 0.0
    %132 = vmatpush1.msra.mxu0 0.0
    %133 = vmatprep.subr.mxu0 0.0
    %134 = vmatpush1.msra.mxu0 0.0
    %135 = vmatprep.subr.mxu0 0.0
    %136 = vmatpush1.msra.mxu0 0.0
    %137 = vmatprep.subr.mxu0 0.0
    %138 = vmatpush1.msra.mxu0 0.0
    %139 = vmatprep.subr.mxu0 0.0
    %140 = vmatpush1.msra.mxu0 0.0
    %141 = vmatprep.subr.mxu0 0.0
    %142 = vmatpush1.msra.mxu0 0.0
    %143 = vmatprep.subr.mxu0 0.0
    %144 = vmatpush1.msra.mxu0 0.0
    %145 = vmatprep.subr.mxu0 0.0
    %146 = vmatpush1.msra.mxu0 0.0
    %147 = vmatprep.subr.mxu0 0.0
    %148 = vmatpush1.msra.mxu0 0.0
    %149 = vmatprep.subr.mxu0 0.0
    %150 = vmatpush1.msra.mxu0 0.0
    %151 = vmatprep.subr.mxu0 0.0
    %152 = vmatpush1.msra.mxu0 0.0
    %153 = vmatprep.subr.mxu0 0.0
    %154 = vmatpush1.msra.mxu0 0.0
    %155 = vmatprep.mubr.f32.mxu0 0.0
    %v156 = vand.u32 %v58, 4294901760
    %v157 = vsub.f32 %v58, %v156
    %v158 = vand.u32 %v157, 4294901760
    %v159 = vsub.f32 %v157, %v158
    %v160 = vand.u32 %v159, 4294901760
    %161 = vmatmul.mubr.f32.gmra.mrb[0].mxu0 %v160
    %v162 = vpop.f32.mrb[0].mxu0
    %v163 = vadd.f32 0.0, %v162
    %v164 = vpop.f32.mrb[0].mxu0
    %165 = vdwg.mxu0
    %166 = vmatprep.subr.mxu0 0.0
    %v167 = vand.u32 %v59, 4294901760
    %v168 = vsub.f32 %v59, %v167
    %v169 = vand.u32 %v168, 4294901760
    %v170 = vsub.f32 %v168, %v169
    %v171 = vand.u32 %v170, 4294901760
    %172 = vmatpush1.msra.mxu0 %v171
    %173 = vmatprep.subr.mxu0 0.0
    %v174 = vand.u32 %v60, 4294901760
    %v175 = vsub.f32 %v60, %v174
    %v176 = vand.u32 %v175, 4294901760
    %v177 = vsub.f32 %v175, %v176
    %v178 = vand.u32 %v177, 4294901760
    %179 = vmatpush1.msra.mxu0 %v178
    %180 = vmatprep.subr.mxu0 0.0
    %v181 = vand.u32 %v61, 4294901760
    %v182 = vsub.f32 %v61, %v181
    %v183 = vand.u32 %v182, 4294901760
    %v184 = vsub.f32 %v182, %v183
    %v185 = vand.u32 %v184, 4294901760
    %186 = vmatpush1.msra.mxu0 %v185
    %187 = vmatprep.subr.mxu0 0.0
    %v188 = vand.u32 %v62, 4294901760
    %v189 = vsub.f32 %v62, %v188
    %v190 = vand.u32 %v189, 4294901760
    %v191 = vsub.f32 %v189, %v190
    %v192 = vand.u32 %v191, 4294901760
    %193 = vmatpush1.msra.mxu0 %v192
    %194 = vmatprep.subr.mxu0 0.0
    %v195 = vand.u32 %v63, 4294901760
    %v196 = vsub.f32 %v63, %v195
    %v197 = vand.u32 %v196, 4294901760
    %v198 = vsub.f32 %v196, %v197
    %v199 = vand.u32 %v198, 4294901760
    %200 = vmatpush1.msra.mxu0 %v199
    %201 = vmatprep.subr.mxu0 0.0
    %v202 = vand.u32 %v64, 4294901760
    %v203 = vsub.f32 %v64, %v202
    %v204 = vand.u32 %v203, 4294901760
    %v205 = vsub.f32 %v203, %v204
    %v206 = vand.u32 %v205, 4294901760
    %207 = vmatpush1.msra.mxu0 %v206
    %208 = vmatprep.subr.mxu0 0.0
    %v209 = vand.u32 %v65, 4294901760
    %v210 = vsub.f32 %v65, %v209
    %v211 = vand.u32 %v210, 4294901760
    %v212 = vsub.f32 %v210, %v211
    %v213 = vand.u32 %v212, 4294901760
    %214 = vmatpush1.msra.mxu0 %v213
    %215 = vmatprep.subr.mxu0 0.0
    %v216 = vand.u32 %v66, 4294901760
    %v217 = vsub.f32 %v66, %v216
    %v218 = vand.u32 %v217, 4294901760
    %v219 = vsub.f32 %v217, %v218
    %v220 = vand.u32 %v219, 4294901760
    %221 = vmatpush1.msra.mxu0 %v220
    %222 = vmatprep.subr.mxu0 0.0
    %v223 = vand.u32 %v67, 4294901760
    %v224 = vsub.f32 %v67, %v223
    %v225 = vand.u32 %v224, 4294901760
    %v226 = vsub.f32 %v224, %v225
    %v227 = vand.u32 %v226, 4294901760
    %228 = vmatpush1.msra.mxu0 %v227
    %229 = vmatprep.subr.mxu0 0.0
    %v230 = vand.u32 %v68, 4294901760
    %v231 = vsub.f32 %v68, %v230
    %v232 = vand.u32 %v231, 4294901760
    %v233 = vsub.f32 %v231, %v232
    %v234 = vand.u32 %v233, 4294901760
    %235 = vmatpush1.msra.mxu0 %v234
    %236 = vmatprep.subr.mxu0 0.0
    %v237 = vand.u32 %v69, 4294901760
    %v238 = vsub.f32 %v69, %v237
    %v239 = vand.u32 %v238, 4294901760
    %v240 = vsub.f32 %v238, %v239
    %v241 = vand.u32 %v240, 4294901760
    %242 = vmatpush1.msra.mxu0 %v241
    %243 = vmatprep.subr.mxu0 0.0
    %v244 = vand.u32 %v70, 4294901760
    %v245 = vsub.f32 %v70, %v244
    %v246 = vand.u32 %v245, 4294901760
    %v247 = vsub.f32 %v245, %v246
    %v248 = vand.u32 %v247, 4294901760
    %249 = vmatpush1.msra.mxu0 %v248
    %250 = vmatprep.subr.mxu0 0.0
    %v251 = vand.u32 %v71, 4294901760
    %v252 = vsub.f32 %v71, %v251
    %v253 = vand.u32 %v252, 4294901760
    %v254 = vsub.f32 %v252, %v253
    %v255 = vand.u32 %v254, 4294901760
    %256 = vmatpush1.msra.mxu0 %v255
    %257 = vmatprep.subr.mxu0 0.0
    %v258 = vand.u32 %v72, 4294901760
    %v259 = vsub.f32 %v72, %v258
    %v260 = vand.u32 %v259, 4294901760
    %v261 = vsub.f32 %v259, %v260
    %v262 = vand.u32 %v261, 4294901760
    %263 = vmatpush1.msra.mxu0 %v262
    %264 = vmatprep.subr.mxu0 0.0
    %v265 = vand.u32 %v73, 4294901760
    %v266 = vsub.f32 %v73, %v265
    %v267 = vand.u32 %v266, 4294901760
    %v268 = vsub.f32 %v266, %v267
    %v269 = vand.u32 %v268, 4294901760
    %270 = vmatpush1.msra.mxu0 %v269
    %271 = vmatprep.subr.mxu0 0.0
    %v272 = vand.u32 %v74, 4294901760
    %v273 = vsub.f32 %v74, %v272
    %v274 = vand.u32 %v273, 4294901760
    %v275 = vsub.f32 %v273, %v274
    %v276 = vand.u32 %v275, 4294901760
    %277 = vmatpush1.msra.mxu0 %v276
    %278 = vmatprep.subr.mxu0 0.0
    %279 = vmatpush1.msra.mxu0 0.0
    %280 = vmatprep.subr.mxu0 0.0
    %281 = vmatpush1.msra.mxu0 0.0
    %282 = vmatprep.subr.mxu0 0.0
    %283 = vmatpush1.msra.mxu0 0.0
    %284 = vmatprep.subr.mxu0 0.0
    %285 = vmatpush1.msra.mxu0 0.0
    %286 = vmatprep.subr.mxu0 0.0
    %287 = vmatpush1.msra.mxu0 0.0
    %288 = vmatprep.subr.mxu0 0.0
    %289 = vmatpush1.msra.mxu0 0.0
    %290 = vmatprep.subr.mxu0 0.0
    %291 = vmatpush1.msra.mxu0 0.0
    %292 = vmatprep.subr.mxu0 0.0
    %293 = vmatpush1.msra.mxu0 0.0
    %294 = vmatprep.subr.mxu0 0.0
    %295 = vmatpush1.msra.mxu0 0.0
    %296 = vmatprep.subr.mxu0 0.0
    %297 = vmatpush1.msra.mxu0 0.0
    %298 = vmatprep.subr.mxu0 0.0
    %299 = vmatpush1.msra.mxu0 0.0
    %300 = vmatprep.subr.mxu0 0.0
    %301 = vmatpush1.msra.mxu0 0.0
    %302 = vmatprep.subr.mxu0 0.0
    %303 = vmatpush1.msra.mxu0 0.0
    %304 = vmatprep.subr.mxu0 0.0
    %305 = vmatpush1.msra.mxu0 0.0
    %306 = vmatprep.subr.mxu0 0.0
    %307 = vmatpush1.msra.mxu0 0.0
    %308 = vmatprep.subr.mxu0 0.0
    %309 = vmatpush1.msra.mxu0 0.0
    %310 = vmatprep.mubr.f32.mxu0 0.0
    %v311 = vand.u32 %v58, 4294901760
    %312 = vmatmul.mubr.f32.gmra.mrb[0].mxu0 %v311
    %v313 = vpop.f32.mrb[0].mxu0
    %v314 = vadd.f32 %v163, %v313
    %v315 = vpop.f32.mrb[0].mxu0
    %316 = vdwg.mxu0
    %317 = vmatprep.subr.mxu0 0.0
    %v318 = vand.u32 %v59, 4294901760
    %v319 = vsub.f32 %v59, %v318
    %320 = vmatpush1.msra.mxu0 %v319
    %321 = vmatprep.subr.mxu0 0.0
    %v322 = vand.u32 %v60, 4294901760
    %v323 = vsub.f32 %v60, %v322
    %324 = vmatpush1.msra.mxu0 %v323
    %325 = vmatprep.subr.mxu0 0.0
    %v326 = vand.u32 %v61, 4294901760
    %v327 = vsub.f32 %v61, %v326
    %328 = vmatpush1.msra.mxu0 %v327
    %329 = vmatprep.subr.mxu0 0.0
    %v330 = vand.u32 %v62, 4294901760
    %v331 = vsub.f32 %v62, %v330
    %332 = vmatpush1.msra.mxu0 %v331
    %333 = vmatprep.subr.mxu0 0.0
    %v334 = vand.u32 %v63, 4294901760
    %v335 = vsub.f32 %v63, %v334
    %336 = vmatpush1.msra.mxu0 %v335
    %337 = vmatprep.subr.mxu0 0.0
    %v338 = vand.u32 %v64, 4294901760
    %v339 = vsub.f32 %v64, %v338
    %340 = vmatpush1.msra.mxu0 %v339
    %341 = vmatprep.subr.mxu0 0.0
    %v342 = vand.u32 %v65, 4294901760
    %v343 = vsub.f32 %v65, %v342
    %344 = vmatpush1.msra.mxu0 %v343
    %345 = vmatprep.subr.mxu0 0.0
    %v346 = vand.u32 %v66, 4294901760
    %v347 = vsub.f32 %v66, %v346
    %348 = vmatpush1.msra.mxu0 %v347
    %349 = vmatprep.subr.mxu0 0.0
    %v350 = vand.u32 %v67, 4294901760
    %v351 = vsub.f32 %v67, %v350
    %352 = vmatpush1.msra.mxu0 %v351
    %353 = vmatprep.subr.mxu0 0.0
    %v354 = vand.u32 %v68, 4294901760
    %v355 = vsub.f32 %v68, %v354
    %356 = vmatpush1.msra.mxu0 %v355
    %357 = vmatprep.subr.mxu0 0.0
    %v358 = vand.u32 %v69, 4294901760
    %v359 = vsub.f32 %v69, %v358
    %360 = vmatpush1.msra.mxu0 %v359
    %361 = vmatprep.subr.mxu0 0.0
    %v362 = vand.u32 %v70, 4294901760
    %v363 = vsub.f32 %v70, %v362
    %364 = vmatpush1.msra.mxu0 %v363
    %365 = vmatprep.subr.mxu0 0.0
    %v366 = vand.u32 %v71, 4294901760
    %v367 = vsub.f32 %v71, %v366
    %368 = vmatpush1.msra.mxu0 %v367
    %369 = vmatprep.subr.mxu0 0.0
    %v370 = vand.u32 %v72, 4294901760
    %v371 = vsub.f32 %v72, %v370
    %372 = vmatpush1.msra.mxu0 %v371
    %373 = vmatprep.subr.mxu0 0.0
    %v374 = vand.u32 %v73, 4294901760
    %v375 = vsub.f32 %v73, %v374
    %376 = vmatpush1.msra.mxu0 %v375
    %377 = vmatprep.subr.mxu0 0.0
    %v378 = vand.u32 %v74, 4294901760
    %v379 = vsub.f32 %v74, %v378
    %380 = vmatpush1.msra.mxu0 %v379
    %381 = vmatprep.subr.mxu0 0.0
    %382 = vmatpush1.msra.mxu0 0.0
    %383 = vmatprep.subr.mxu0 0.0
    %384 = vmatpush1.msra.mxu0 0.0
    %385 = vmatprep.subr.mxu0 0.0
    %386 = vmatpush1.msra.mxu0 0.0
    %387 = vmatprep.subr.mxu0 0.0
    %388 = vmatpush1.msra.mxu0 0.0
    %389 = vmatprep.subr.mxu0 0.0
    %390 = vmatpush1.msra.mxu0 0.0
    %391 = vmatprep.subr.mxu0 0.0
    %392 = vmatpush1.msra.mxu0 0.0
    %393 = vmatprep.subr.mxu0 0.0
    %394 = vmatpush1.msra.mxu0 0.0
    %395 = vmatprep.subr.mxu0 0.0
    %396 = vmatpush1.msra.mxu0 0.0
    %397 = vmatprep.subr.mxu0 0.0
    %398 = vmatpush1.msra.mxu0 0.0
    %399 = vmatprep.subr.mxu0 0.0
    %400 = vmatpush1.msra.mxu0 0.0
    %401 = vmatprep.subr.mxu0 0.0
    %402 = vmatpush1.msra.mxu0 0.0
    %403 = vmatprep.subr.mxu0 0.0
    %404 = vmatpush1.msra.mxu0 0.0
    %405 = vmatprep.subr.mxu0 0.0
    %406 = vmatpush1.msra.mxu0 0.0
    %407 = vmatprep.subr.mxu0 0.0
    %408 = vmatpush1.msra.mxu0 0.0
    %409 = vmatprep.subr.mxu0 0.0
    %410 = vmatpush1.msra.mxu0 0.0
    %411 = vmatprep.subr.mxu0 0.0
    %412 = vmatpush1.msra.mxu0 0.0
    %413 = vmatprep.mubr.f32.mxu0 0.0
    %v414 = vand.u32 %v58, 4294901760
    %v415 = vsub.f32 %v58, %v414
    %416 = vmatmul.mubr.f32.gmra.mrb[0].mxu0 %v415
    %v417 = vpop.f32.mrb[0].mxu0
    %v418 = vadd.f32 %v314, %v417
    %v419 = vpop.f32.mrb[0].mxu0
    %420 = vdwg.mxu0
    %421 = vmatprep.subr.mxu0 0.0
    %v422 = vand.u32 %v59, 4294901760
    %423 = vmatpush1.msra.mxu0 %v422
    %424 = vmatprep.subr.mxu0 0.0
    %v425 = vand.u32 %v60, 4294901760
    %426 = vmatpush1.msra.mxu0 %v425
    %427 = vmatprep.subr.mxu0 0.0
    %v428 = vand.u32 %v61, 4294901760
    %429 = vmatpush1.msra.mxu0 %v428
    %430 = vmatprep.subr.mxu0 0.0
    %v431 = vand.u32 %v62, 4294901760
    %432 = vmatpush1.msra.mxu0 %v431
    %433 = vmatprep.subr.mxu0 0.0
    %v434 = vand.u32 %v63, 4294901760
    %435 = vmatpush1.msra.mxu0 %v434
    %436 = vmatprep.subr.mxu0 0.0
    %v437 = vand.u32 %v64, 4294901760
    %438 = vmatpush1.msra.mxu0 %v437
    %439 = vmatprep.subr.mxu0 0.0
    %v440 = vand.u32 %v65, 4294901760
    %441 = vmatpush1.msra.mxu0 %v440
    %442 = vmatprep.subr.mxu0 0.0
    %v443 = vand.u32 %v66, 4294901760
    %444 = vmatpush1.msra.mxu0 %v443
    %445 = vmatprep.subr.mxu0 0.0
    %v446 = vand.u32 %v67, 4294901760
    %447 = vmatpush1.msra.mxu0 %v446
    %448 = vmatprep.subr.mxu0 0.0
    %v449 = vand.u32 %v68, 4294901760
    %450 = vmatpush1.msra.mxu0 %v449
    %451 = vmatprep.subr.mxu0 0.0
    %v452 = vand.u32 %v69, 4294901760
    %453 = vmatpush1.msra.mxu0 %v452
    %454 = vmatprep.subr.mxu0 0.0
    %v455 = vand.u32 %v70, 4294901760
    %456 = vmatpush1.msra.mxu0 %v455
    %457 = vmatprep.subr.mxu0 0.0
    %v458 = vand.u32 %v71, 4294901760
    %459 = vmatpush1.msra.mxu0 %v458
    %460 = vmatprep.subr.mxu0 0.0
    %v461 = vand.u32 %v72, 4294901760
    %462 = vmatpush1.msra.mxu0 %v461
    %463 = vmatprep.subr.mxu0 0.0
    %v464 = vand.u32 %v73, 4294901760
    %465 = vmatpush1.msra.mxu0 %v464
    %466 = vmatprep.subr.mxu0 0.0
    %v467 = vand.u32 %v74, 4294901760
    %468 = vmatpush1.msra.mxu0 %v467
    %469 = vmatprep.subr.mxu0 0.0
    %470 = vmatpush1.msra.mxu0 0.0
    %471 = vmatprep.subr.mxu0 0.0
    %472 = vmatpush1.msra.mxu0 0.0
    %473 = vmatprep.subr.mxu0 0.0
    %474 = vmatpush1.msra.mxu0 0.0
    %475 = vmatprep.subr.mxu0 0.0
    %476 = vmatpush1.msra.mxu0 0.0
    %477 = vmatprep.subr.mxu0 0.0
    %478 = vmatpush1.msra.mxu0 0.0
    %479 = vmatprep.subr.mxu0 0.0
    %480 = vmatpush1.msra.mxu0 0.0
    %481 = vmatprep.subr.mxu0 0.0
    %482 = vmatpush1.msra.mxu0 0.0
    %483 = vmatprep.subr.mxu0 0.0
    %484 = vmatpush1.msra.mxu0 0.0
    %485 = vmatprep.subr.mxu0 0.0
    %486 = vmatpush1.msra.mxu0 0.0
    %487 = vmatprep.subr.mxu0 0.0
    %488 = vmatpush1.msra.mxu0 0.0
    %489 = vmatprep.subr.mxu0 0.0
    %490 = vmatpush1.msra.mxu0 0.0
    %491 = vmatprep.subr.mxu0 0.0
    %492 = vmatpush1.msra.mxu0 0.0
    %493 = vmatprep.subr.mxu0 0.0
    %494 = vmatpush1.msra.mxu0 0.0
    %495 = vmatprep.subr.mxu0 0.0
    %496 = vmatpush1.msra.mxu0 0.0
    %497 = vmatprep.subr.mxu0 0.0
    %498 = vmatpush1.msra.mxu0 0.0
    %499 = vmatprep.subr.mxu0 0.0
    %500 = vmatpush1.msra.mxu0 0.0
    %501 = vmatprep.mubr.f32.mxu0 0.0
    %v502 = vand.u32 %v58, 4294901760
    %v503 = vsub.f32 %v58, %v502
    %v504 = vand.u32 %v503, 4294901760
    %505 = vmatmul.mubr.f32.gmra.mrb[0].mxu0 %v504
    %v506 = vpop.f32.mrb[0].mxu0
    %v507 = vadd.f32 %v418, %v506
    %v508 = vpop.f32.mrb[0].mxu0
    %509 = vdwg.mxu0
    %510 = vmatprep.subr.mxu0 0.0
    %v511 = vand.u32 %v59, 4294901760
    %v512 = vsub.f32 %v59, %v511
    %v513 = vand.u32 %v512, 4294901760
    %514 = vmatpush1.msra.mxu0 %v513
    %515 = vmatprep.subr.mxu0 0.0
    %v516 = vand.u32 %v60, 4294901760
    %v517 = vsub.f32 %v60, %v516
    %v518 = vand.u32 %v517, 4294901760
    %519 = vmatpush1.msra.mxu0 %v518
    %520 = vmatprep.subr.mxu0 0.0
    %v521 = vand.u32 %v61, 4294901760
    %v522 = vsub.f32 %v61, %v521
    %v523 = vand.u32 %v522, 4294901760
    %524 = vmatpush1.msra.mxu0 %v523
    %525 = vmatprep.subr.mxu0 0.0
    %v526 = vand.u32 %v62, 4294901760
    %v527 = vsub.f32 %v62, %v526
    %v528 = vand.u32 %v527, 4294901760
    %529 = vmatpush1.msra.mxu0 %v528
    %530 = vmatprep.subr.mxu0 0.0
    %v531 = vand.u32 %v63, 4294901760
    %v532 = vsub.f32 %v63, %v531
    %v533 = vand.u32 %v532, 4294901760
    %534 = vmatpush1.msra.mxu0 %v533
    %535 = vmatprep.subr.mxu0 0.0
    %v536 = vand.u32 %v64, 4294901760
    %v537 = vsub.f32 %v64, %v536
    %v538 = vand.u32 %v537, 4294901760
    %539 = vmatpush1.msra.mxu0 %v538
    %540 = vmatprep.subr.mxu0 0.0
    %v541 = vand.u32 %v65, 4294901760
    %v542 = vsub.f32 %v65, %v541
    %v543 = vand.u32 %v542, 4294901760
    %544 = vmatpush1.msra.mxu0 %v543
    %545 = vmatprep.subr.mxu0 0.0
    %v546 = vand.u32 %v66, 4294901760
    %v547 = vsub.f32 %v66, %v546
    %v548 = vand.u32 %v547, 4294901760
    %549 = vmatpush1.msra.mxu0 %v548
    %550 = vmatprep.subr.mxu0 0.0
    %v551 = vand.u32 %v67, 4294901760
    %v552 = vsub.f32 %v67, %v551
    %v553 = vand.u32 %v552, 4294901760
    %554 = vmatpush1.msra.mxu0 %v553
    %555 = vmatprep.subr.mxu0 0.0
    %v556 = vand.u32 %v68, 4294901760
    %v557 = vsub.f32 %v68, %v556
    %v558 = vand.u32 %v557, 4294901760
    %559 = vmatpush1.msra.mxu0 %v558
    %560 = vmatprep.subr.mxu0 0.0
    %v561 = vand.u32 %v69, 4294901760
    %v562 = vsub.f32 %v69, %v561
    %v563 = vand.u32 %v562, 4294901760
    %564 = vmatpush1.msra.mxu0 %v563
    %565 = vmatprep.subr.mxu0 0.0
    %v566 = vand.u32 %v70, 4294901760
    %v567 = vsub.f32 %v70, %v566
    %v568 = vand.u32 %v567, 4294901760
    %569 = vmatpush1.msra.mxu0 %v568
    %570 = vmatprep.subr.mxu0 0.0
    %v571 = vand.u32 %v71, 4294901760
    %v572 = vsub.f32 %v71, %v571
    %v573 = vand.u32 %v572, 4294901760
    %574 = vmatpush1.msra.mxu0 %v573
    %575 = vmatprep.subr.mxu0 0.0
    %v576 = vand.u32 %v72, 4294901760
    %v577 = vsub.f32 %v72, %v576
    %v578 = vand.u32 %v577, 4294901760
    %579 = vmatpush1.msra.mxu0 %v578
    %580 = vmatprep.subr.mxu0 0.0
    %v581 = vand.u32 %v73, 4294901760
    %v582 = vsub.f32 %v73, %v581
    %v583 = vand.u32 %v582, 4294901760
    %584 = vmatpush1.msra.mxu0 %v583
    %585 = vmatprep.subr.mxu0 0.0
    %v586 = vand.u32 %v74, 4294901760
    %v587 = vsub.f32 %v74, %v586
    %v588 = vand.u32 %v587, 4294901760
    %589 = vmatpush1.msra.mxu0 %v588
    %590 = vmatprep.subr.mxu0 0.0
    %591 = vmatpush1.msra.mxu0 0.0
    %592 = vmatprep.subr.mxu0 0.0
    %593 = vmatpush1.msra.mxu0 0.0
    %594 = vmatprep.subr.mxu0 0.0
    %595 = vmatpush1.msra.mxu0 0.0
    %596 = vmatprep.subr.mxu0 0.0
    %597 = vmatpush1.msra.mxu0 0.0
    %598 = vmatprep.subr.mxu0 0.0
    %599 = vmatpush1.msra.mxu0 0.0
    %600 = vmatprep.subr.mxu0 0.0
    %601 = vmatpush1.msra.mxu0 0.0
    %602 = vmatprep.subr.mxu0 0.0
    %603 = vmatpush1.msra.mxu0 0.0
    %604 = vmatprep.subr.mxu0 0.0
    %605 = vmatpush1.msra.mxu0 0.0
    %606 = vmatprep.subr.mxu0 0.0
    %607 = vmatpush1.msra.mxu0 0.0
    %608 = vmatprep.subr.mxu0 0.0
    %609 = vmatpush1.msra.mxu0 0.0
    %610 = vmatprep.subr.mxu0 0.0
    %611 = vmatpush1.msra.mxu0 0.0
    %612 = vmatprep.subr.mxu0 0.0
    %613 = vmatpush1.msra.mxu0 0.0
    %614 = vmatprep.subr.mxu0 0.0
    %615 = vmatpush1.msra.mxu0 0.0
    %616 = vmatprep.subr.mxu0 0.0
    %617 = vmatpush1.msra.mxu0 0.0
    %618 = vmatprep.subr.mxu0 0.0
    %619 = vmatpush1.msra.mxu0 0.0
    %620 = vmatprep.subr.mxu0 0.0
    %621 = vmatpush1.msra.mxu0 0.0
    %622 = vmatprep.mubr.f32.mxu0 0.0
    %v623 = vand.u32 %v58, 4294901760
    %624 = vmatmul.mubr.f32.gmra.mrb[0].mxu0 %v623
    %v625 = vpop.f32.mrb[0].mxu0
    %v626 = vadd.f32 %v507, %v625
    %v627 = vpop.f32.mrb[0].mxu0
    %628 = vdwg.mxu0
    %629 = vmatprep.subr.mxu0 0.0
    %v630 = vand.u32 %v59, 4294901760
    %631 = vmatpush1.msra.mxu0 %v630
    %632 = vmatprep.subr.mxu0 0.0
    %v633 = vand.u32 %v60, 4294901760
    %634 = vmatpush1.msra.mxu0 %v633
    %635 = vmatprep.subr.mxu0 0.0
    %v636 = vand.u32 %v61, 4294901760
    %637 = vmatpush1.msra.mxu0 %v636
    %638 = vmatprep.subr.mxu0 0.0
    %v639 = vand.u32 %v62, 4294901760
    %640 = vmatpush1.msra.mxu0 %v639
    %641 = vmatprep.subr.mxu0 0.0
    %v642 = vand.u32 %v63, 4294901760
    %643 = vmatpush1.msra.mxu0 %v642
    %644 = vmatprep.subr.mxu0 0.0
    %v645 = vand.u32 %v64, 4294901760
    %646 = vmatpush1.msra.mxu0 %v645
    %647 = vmatprep.subr.mxu0 0.0
    %v648 = vand.u32 %v65, 4294901760
    %649 = vmatpush1.msra.mxu0 %v648
    %650 = vmatprep.subr.mxu0 0.0
    %v651 = vand.u32 %v66, 4294901760
    %652 = vmatpush1.msra.mxu0 %v651
    %653 = vmatprep.subr.mxu0 0.0
    %v654 = vand.u32 %v67, 4294901760
    %655 = vmatpush1.msra.mxu0 %v654
    %656 = vmatprep.subr.mxu0 0.0
    %v657 = vand.u32 %v68, 4294901760
    %658 = vmatpush1.msra.mxu0 %v657
    %659 = vmatprep.subr.mxu0 0.0
    %v660 = vand.u32 %v69, 4294901760
    %661 = vmatpush1.msra.mxu0 %v660
    %662 = vmatprep.subr.mxu0 0.0
    %v663 = vand.u32 %v70, 4294901760
    %664 = vmatpush1.msra.mxu0 %v663
    %665 = vmatprep.subr.mxu0 0.0
    %v666 = vand.u32 %v71, 4294901760
    %667 = vmatpush1.msra.mxu0 %v666
    %668 = vmatprep.subr.mxu0 0.0
    %v669 = vand.u32 %v72, 4294901760
    %670 = vmatpush1.msra.mxu0 %v669
    %671 = vmatprep.subr.mxu0 0.0
    %v672 = vand.u32 %v73, 4294901760
    %673 = vmatpush1.msra.mxu0 %v672
    %674 = vmatprep.subr.mxu0 0.0
    %v675 = vand.u32 %v74, 4294901760
    %676 = vmatpush1.msra.mxu0 %v675
    %677 = vmatprep.subr.mxu0 0.0
    %678 = vmatpush1.msra.mxu0 0.0
    %679 = vmatprep.subr.mxu0 0.0
    %680 = vmatpush1.msra.mxu0 0.0
    %681 = vmatprep.subr.mxu0 0.0
    %682 = vmatpush1.msra.mxu0 0.0
    %683 = vmatprep.subr.mxu0 0.0
    %684 = vmatpush1.msra.mxu0 0.0
    %685 = vmatprep.subr.mxu0 0.0
    %686 = vmatpush1.msra.mxu0 0.0
    %687 = vmatprep.subr.mxu0 0.0
    %688 = vmatpush1.msra.mxu0 0.0
    %689 = vmatprep.subr.mxu0 0.0
    %690 = vmatpush1.msra.mxu0 0.0
    %691 = vmatprep.subr.mxu0 0.0
    %692 = vmatpush1.msra.mxu0 0.0
    %693 = vmatprep.subr.mxu0 0.0
    %694 = vmatpush1.msra.mxu0 0.0
    %695 = vmatprep.subr.mxu0 0.0
    %696 = vmatpush1.msra.mxu0 0.0
    %697 = vmatprep.subr.mxu0 0.0
    %698 = vmatpush1.msra.mxu0 0.0
    %699 = vmatprep.subr.mxu0 0.0
    %700 = vmatpush1.msra.mxu0 0.0
    %701 = vmatprep.subr.mxu0 0.0
    %702 = vmatpush1.msra.mxu0 0.0
    %703 = vmatprep.subr.mxu0 0.0
    %704 = vmatpush1.msra.mxu0 0.0
    %705 = vmatprep.subr.mxu0 0.0
    %706 = vmatpush1.msra.mxu0 0.0
    %707 = vmatprep.subr.mxu0 0.0
    %708 = vmatpush1.msra.mxu0 0.0
    %709 = vmatprep.mubr.f32.mxu0 0.0
    %v710 = vand.u32 %v58, 4294901760
    %711 = vmatmul.mubr.f32.gmra.mrb[0].mxu0 %v710
    %v712 = vpop.f32.mrb[0].mxu0
    %v713 = vadd.f32 %v626, %v712
    %v714 = vpop.f32.mrb[0].mxu0
    %715 = vdwg.mxu0
    %v716 = vld [vmem:[#allocation5] sm:$0xff]
    %v717 = vld [vmem:[#allocation5 + $0x8] sm:$0xff]
    %v718 = vld [vmem:[#allocation5 + $0x10] sm:$0xff]
    %v719 = vld [vmem:[#allocation5 + $0x18] sm:$0xff]
    %v720 = vld [vmem:[#allocation5 + $0x20] sm:$0xff]
    %v721 = vld [vmem:[#allocation5 + $0x28] sm:$0xff]
    %v722 = vld [vmem:[#allocation5 + $0x30] sm:$0xff]
    %v723 = vld [vmem:[#allocation5 + $0x38] sm:$0xff]
    %v724 = vld [vmem:[#allocation5 + $0x40] sm:$0xff]
    %v725 = vld [vmem:[#allocation5 + $0x48] sm:$0xff]
    %v726 = vld [vmem:[#allocation5 + $0x50] sm:$0xff]
    %v727 = vld [vmem:[#allocation5 + $0x58] sm:$0xff]
    %v728 = vld [vmem:[#allocation5 + $0x60] sm:$0xff]
    %v729 = vld [vmem:[#allocation5 + $0x68] sm:$0xff]
    %v730 = vld [vmem:[#allocation5 + $0x70] sm:$0xff]
    %v731 = vld [vmem:[#allocation5 + $0x78] sm:$0xff]
    %732 = vmatprep.subr.mxu0 0.0
    %v733 = vand.u32 %v716, 4294901760
    %734 = vmatpush1.msra.mxu0 %v733
    %735 = vmatprep.subr.mxu0 0.0
    %v736 = vand.u32 %v717, 4294901760
    %737 = vmatpush1.msra.mxu0 %v736
    %738 = vmatprep.subr.mxu0 0.0
    %v739 = vand.u32 %v718, 4294901760
    %740 = vmatpush1.msra.mxu0 %v739
    %741 = vmatprep.subr.mxu0 0.0
    %v742 = vand.u32 %v719, 4294901760
    %743 = vmatpush1.msra.mxu0 %v742
    %744 = vmatprep.subr.mxu0 0.0
    %v745 = vand.u32 %v720, 4294901760
    %746 = vmatpush1.msra.mxu0 %v745
    %747 = vmatprep.subr.mxu0 0.0
    %v748 = vand.u32 %v721, 4294901760
    %749 = vmatpush1.msra.mxu0 %v748
    %750 = vmatprep.subr.mxu0 0.0
    %v751 = vand.u32 %v722, 4294901760
    %752 = vmatpush1.msra.mxu0 %v751
    %753 = vmatprep.subr.mxu0 0.0
    %v754 = vand.u32 %v723, 4294901760
    %755 = vmatpush1.msra.mxu0 %v754
    %756 = vmatprep.subr.mxu0 0.0
    %v757 = vand.u32 %v724, 4294901760
    %758 = vmatpush1.msra.mxu0 %v757
    %759 = vmatprep.subr.mxu0 0.0
    %v760 = vand.u32 %v725, 4294901760
    %761 = vmatpush1.msra.mxu0 %v760
    %762 = vmatprep.subr.mxu0 0.0
    %v763 = vand.u32 %v726, 4294901760
    %764 = vmatpush1.msra.mxu0 %v763
    %765 = vmatprep.subr.mxu0 0.0
    %v766 = vand.u32 %v727, 4294901760
    %767 = vmatpush1.msra.mxu0 %v766
    %768 = vmatprep.subr.mxu0 0.0
    %v769 = vand.u32 %v728, 4294901760
    %770 = vmatpush1.msra.mxu0 %v769
    %771 = vmatprep.subr.mxu0 0.0
    %v772 = vand.u32 %v729, 4294901760
    %773 = vmatpush1.msra.mxu0 %v772
    %774 = vmatprep.subr.mxu0 0.0
    %v775 = vand.u32 %v730, 4294901760
    %776 = vmatpush1.msra.mxu0 %v775
    %777 = vmatprep.subr.mxu0 0.0
    %v778 = vand.u32 %v731, 4294901760
    %779 = vmatpush1.msra.mxu0 %v778
    %780 = vmatprep.subr.mxu0 0.0
    %781 = vmatpush1.msra.mxu0 0.0
    %782 = vmatprep.subr.mxu0 0.0
    %783 = vmatpush1.msra.mxu0 0.0
    %784 = vmatprep.subr.mxu0 0.0
    %785 = vmatpush1.msra.mxu0 0.0
    %786 = vmatprep.subr.mxu0 0.0
    %787 = vmatpush1.msra.mxu0 0.0
    %788 = vmatprep.subr.mxu0 0.0
    %789 = vmatpush1.msra.mxu0 0.0
    %790 = vmatprep.subr.mxu0 0.0
    %791 = vmatpush1.msra.mxu0 0.0
    %792 = vmatprep.subr.mxu0 0.0
    %793 = vmatpush1.msra.mxu0 0.0
    %794 = vmatprep.subr.mxu0 0.0
    %795 = vmatpush1.msra.mxu0 0.0
    %796 = vmatprep.subr.mxu0 0.0
    %797 = vmatpush1.msra.mxu0 0.0
    %798 = vmatprep.subr.mxu0 0.0
    %799 = vmatpush1.msra.mxu0 0.0
    %800 = vmatprep.subr.mxu0 0.0
    %801 = vmatpush1.msra.mxu0 0.0
    %802 = vmatprep.subr.mxu0 0.0
    %803 = vmatpush1.msra.mxu0 0.0
    %804 = vmatprep.subr.mxu0 0.0
    %805 = vmatpush1.msra.mxu0 0.0
    %806 = vmatprep.subr.mxu0 0.0
    %807 = vmatpush1.msra.mxu0 0.0
    %808 = vmatprep.subr.mxu0 0.0
    %809 = vmatpush1.msra.mxu0 0.0
    %810 = vmatprep.subr.mxu0 0.0
    %811 = vmatpush1.msra.mxu0 0.0
    %812 = vmatprep.mubr.f32.mxu0 0.0
    %v813 = vand.u32 %v58, 4294901760
    %v814 = vsub.f32 %v58, %v813
    %v815 = vand.u32 %v814, 4294901760
    %v816 = vsub.f32 %v814, %v815
    %v817 = vand.u32 %v816, 4294901760
    %818 = vmatmul.mubr.f32.gmra.mrb[0].mxu0 %v817
    %v819 = vpop.f32.mrb[0].mxu0
    %v820 = vadd.f32 0.0, %v819
    %v821 = vpop.f32.mrb[0].mxu0
    %822 = vdwg.mxu0
    %823 = vmatprep.subr.mxu0 0.0
    %v824 = vand.u32 %v716, 4294901760
    %v825 = vsub.f32 %v716, %v824
    %v826 = vand.u32 %v825, 4294901760
    %v827 = vsub.f32 %v825, %v826
    %v828 = vand.u32 %v827, 4294901760
    %829 = vmatpush1.msra.mxu0 %v828
    %830 = vmatprep.subr.mxu0 0.0
    %v831 = vand.u32 %v717, 4294901760
    %v832 = vsub.f32 %v717, %v831
    %v833 = vand.u32 %v832, 4294901760
    %v834 = vsub.f32 %v832, %v833
    %v835 = vand.u32 %v834, 4294901760
    %836 = vmatpush1.msra.mxu0 %v835
    %837 = vmatprep.subr.mxu0 0.0
    %v838 = vand.u32 %v718, 4294901760
    %v839 = vsub.f32 %v718, %v838
    %v840 = vand.u32 %v839, 4294901760
    %v841 = vsub.f32 %v839, %v840
    %v842 = vand.u32 %v841, 4294901760
    %843 = vmatpush1.msra.mxu0 %v842
    %844 = vmatprep.subr.mxu0 0.0
    %v845 = vand.u32 %v719, 4294901760
    %v846 = vsub.f32 %v719, %v845
    %v847 = vand.u32 %v846, 4294901760
    %v848 = vsub.f32 %v846, %v847
    %v849 = vand.u32 %v848, 4294901760
    %850 = vmatpush1.msra.mxu0 %v849
    %851 = vmatprep.subr.mxu0 0.0
    %v852 = vand.u32 %v720, 4294901760
    %v853 = vsub.f32 %v720, %v852
    %v854 = vand.u32 %v853, 4294901760
    %v855 = vsub.f32 %v853, %v854
    %v856 = vand.u32 %v855, 4294901760
    %857 = vmatpush1.msra.mxu0 %v856
    %858 = vmatprep.subr.mxu0 0.0
    %v859 = vand.u32 %v721, 4294901760
    %v860 = vsub.f32 %v721, %v859
    %v861 = vand.u32 %v860, 4294901760
    %v862 = vsub.f32 %v860, %v861
    %v863 = vand.u32 %v862, 4294901760
    %864 = vmatpush1.msra.mxu0 %v863
    %865 = vmatprep.subr.mxu0 0.0
    %v866 = vand.u32 %v722, 4294901760
    %v867 = vsub.f32 %v722, %v866
    %v868 = vand.u32 %v867, 4294901760
    %v869 = vsub.f32 %v867, %v868
    %v870 = vand.u32 %v869, 4294901760
    %871 = vmatpush1.msra.mxu0 %v870
    %872 = vmatprep.subr.mxu0 0.0
    %v873 = vand.u32 %v723, 4294901760
    %v874 = vsub.f32 %v723, %v873
    %v875 = vand.u32 %v874, 4294901760
    %v876 = vsub.f32 %v874, %v875
    %v877 = vand.u32 %v876, 4294901760
    %878 = vmatpush1.msra.mxu0 %v877
    %879 = vmatprep.subr.mxu0 0.0
    %v880 = vand.u32 %v724, 4294901760
    %v881 = vsub.f32 %v724, %v880
    %v882 = vand.u32 %v881, 4294901760
    %v883 = vsub.f32 %v881, %v882
    %v884 = vand.u32 %v883, 4294901760
    %885 = vmatpush1.msra.mxu0 %v884
    %886 = vmatprep.subr.mxu0 0.0
    %v887 = vand.u32 %v725, 4294901760
    %v888 = vsub.f32 %v725, %v887
    %v889 = vand.u32 %v888, 4294901760
    %v890 = vsub.f32 %v888, %v889
    %v891 = vand.u32 %v890, 4294901760
    %892 = vmatpush1.msra.mxu0 %v891
    %893 = vmatprep.subr.mxu0 0.0
    %v894 = vand.u32 %v726, 4294901760
    %v895 = vsub.f32 %v726, %v894
    %v896 = vand.u32 %v895, 4294901760
    %v897 = vsub.f32 %v895, %v896
    %v898 = vand.u32 %v897, 4294901760
    %899 = vmatpush1.msra.mxu0 %v898
    %900 = vmatprep.subr.mxu0 0.0
    %v901 = vand.u32 %v727, 4294901760
    %v902 = vsub.f32 %v727, %v901
    %v903 = vand.u32 %v902, 4294901760
    %v904 = vsub.f32 %v902, %v903
    %v905 = vand.u32 %v904, 4294901760
    %906 = vmatpush1.msra.mxu0 %v905
    %907 = vmatprep.subr.mxu0 0.0
    %v908 = vand.u32 %v728, 4294901760
    %v909 = vsub.f32 %v728, %v908
    %v910 = vand.u32 %v909, 4294901760
    %v911 = vsub.f32 %v909, %v910
    %v912 = vand.u32 %v911, 4294901760
    %913 = vmatpush1.msra.mxu0 %v912
    %914 = vmatprep.subr.mxu0 0.0
    %v915 = vand.u32 %v729, 4294901760
    %v916 = vsub.f32 %v729, %v915
    %v917 = vand.u32 %v916, 4294901760
    %v918 = vsub.f32 %v916, %v917
    %v919 = vand.u32 %v918, 4294901760
    %920 = vmatpush1.msra.mxu0 %v919
    %921 = vmatprep.subr.mxu0 0.0
    %v922 = vand.u32 %v730, 4294901760
    %v923 = vsub.f32 %v730, %v922
    %v924 = vand.u32 %v923, 4294901760
    %v925 = vsub.f32 %v923, %v924
    %v926 = vand.u32 %v925, 4294901760
    %927 = vmatpush1.msra.mxu0 %v926
    %928 = vmatprep.subr.mxu0 0.0
    %v929 = vand.u32 %v731, 4294901760
    %v930 = vsub.f32 %v731, %v929
    %v931 = vand.u32 %v930, 4294901760
    %v932 = vsub.f32 %v930, %v931
    %v933 = vand.u32 %v932, 4294901760
    %934 = vmatpush1.msra.mxu0 %v933
    %935 = vmatprep.subr.mxu0 0.0
    %936 = vmatpush1.msra.mxu0 0.0
    %937 = vmatprep.subr.mxu0 0.0
    %938 = vmatpush1.msra.mxu0 0.0
    %939 = vmatprep.subr.mxu0 0.0
    %940 = vmatpush1.msra.mxu0 0.0
    %941 = vmatprep.subr.mxu0 0.0
    %942 = vmatpush1.msra.mxu0 0.0
    %943 = vmatprep.subr.mxu0 0.0
    %944 = vmatpush1.msra.mxu0 0.0
    %945 = vmatprep.subr.mxu0 0.0
    %946 = vmatpush1.msra.mxu0 0.0
    %947 = vmatprep.subr.mxu0 0.0
    %948 = vmatpush1.msra.mxu0 0.0
    %949 = vmatprep.subr.mxu0 0.0
    %950 = vmatpush1.msra.mxu0 0.0
    %951 = vmatprep.subr.mxu0 0.0
    %952 = vmatpush1.msra.mxu0 0.0
    %953 = vmatprep.subr.mxu0 0.0
    %954 = vmatpush1.msra.mxu0 0.0
    %955 = vmatprep.subr.mxu0 0.0
    %956 = vmatpush1.msra.mxu0 0.0
    %957 = vmatprep.subr.mxu0 0.0
    %958 = vmatpush1.msra.mxu0 0.0
    %959 = vmatprep.subr.mxu0 0.0
    %960 = vmatpush1.msra.mxu0 0.0
    %961 = vmatprep.subr.mxu0 0.0
    %962 = vmatpush1.msra.mxu0 0.0
    %963 = vmatprep.subr.mxu0 0.0
    %964 = vmatpush1.msra.mxu0 0.0
    %965 = vmatprep.subr.mxu0 0.0
    %966 = vmatpush1.msra.mxu0 0.0
    %967 = vmatprep.mubr.f32.mxu0 0.0
    %v968 = vand.u32 %v58, 4294901760
    %969 = vmatmul.mubr.f32.gmra.mrb[0].mxu0 %v968
    %v970 = vpop.f32.mrb[0].mxu0
    %v971 = vadd.f32 %v820, %v970
    %v972 = vpop.f32.mrb[0].mxu0
    %973 = vdwg.mxu0
    %974 = vmatprep.subr.mxu0 0.0
    %v975 = vand.u32 %v716, 4294901760
    %v976 = vsub.f32 %v716, %v975
    %977 = vmatpush1.msra.mxu0 %v976
    %978 = vmatprep.subr.mxu0 0.0
    %v979 = vand.u32 %v717, 4294901760
    %v980 = vsub.f32 %v717, %v979
    %981 = vmatpush1.msra.mxu0 %v980
    %982 = vmatprep.subr.mxu0 0.0
    %v983 = vand.u32 %v718, 4294901760
    %v984 = vsub.f32 %v718, %v983
    %985 = vmatpush1.msra.mxu0 %v984
    %986 = vmatprep.subr.mxu0 0.0
    %v987 = vand.u32 %v719, 4294901760
    %v988 = vsub.f32 %v719, %v987
    %989 = vmatpush1.msra.mxu0 %v988
    %990 = vmatprep.subr.mxu0 0.0
    %v991 = vand.u32 %v720, 4294901760
    %v992 = vsub.f32 %v720, %v991
    %993 = vmatpush1.msra.mxu0 %v992
    %994 = vmatprep.subr.mxu0 0.0
    %v995 = vand.u32 %v721, 4294901760
    %v996 = vsub.f32 %v721, %v995
    %997 = vmatpush1.msra.mxu0 %v996
    %998 = vmatprep.subr.mxu0 0.0
    %v999 = vand.u32 %v722, 4294901760
    %v1000 = vsub.f32 %v722, %v999
    %1001 = vmatpush1.msra.mxu0 %v1000
    %1002 = vmatprep.subr.mxu0 0.0
    %v1003 = vand.u32 %v723, 4294901760
    %v1004 = vsub.f32 %v723, %v1003
    %1005 = vmatpush1.msra.mxu0 %v1004
    %1006 = vmatprep.subr.mxu0 0.0
    %v1007 = vand.u32 %v724, 4294901760
    %v1008 = vsub.f32 %v724, %v1007
    %1009 = vmatpush1.msra.mxu0 %v1008
    %1010 = vmatprep.subr.mxu0 0.0
    %v1011 = vand.u32 %v725, 4294901760
    %v1012 = vsub.f32 %v725, %v1011
    %1013 = vmatpush1.msra.mxu0 %v1012
    %1014 = vmatprep.subr.mxu0 0.0
    %v1015 = vand.u32 %v726, 4294901760
    %v1016 = vsub.f32 %v726, %v1015
    %1017 = vmatpush1.msra.mxu0 %v1016
    %1018 = vmatprep.subr.mxu0 0.0
    %v1019 = vand.u32 %v727, 4294901760
    %v1020 = vsub.f32 %v727, %v1019
    %1021 = vmatpush1.msra.mxu0 %v1020
    %1022 = vmatprep.subr.mxu0 0.0
    %v1023 = vand.u32 %v728, 4294901760
    %v1024 = vsub.f32 %v728, %v1023
    %1025 = vmatpush1.msra.mxu0 %v1024
    %1026 = vmatprep.subr.mxu0 0.0
    %v1027 = vand.u32 %v729, 4294901760
    %v1028 = vsub.f32 %v729, %v1027
    %1029 = vmatpush1.msra.mxu0 %v1028
    %1030 = vmatprep.subr.mxu0 0.0
    %v1031 = vand.u32 %v730, 4294901760
    %v1032 = vsub.f32 %v730, %v1031
    %1033 = vmatpush1.msra.mxu0 %v1032
    %1034 = vmatprep.subr.mxu0 0.0
    %v1035 = vand.u32 %v731, 4294901760
    %v1036 = vsub.f32 %v731, %v1035
    %1037 = vmatpush1.msra.mxu0 %v1036
    %1038 = vmatprep.subr.mxu0 0.0
    %1039 = vmatpush1.msra.mxu0 0.0
    %1040 = vmatprep.subr.mxu0 0.0
    %1041 = vmatpush1.msra.mxu0 0.0
    %1042 = vmatprep.subr.mxu0 0.0
    %1043 = vmatpush1.msra.mxu0 0.0
    %1044 = vmatprep.subr.mxu0 0.0
    %1045 = vmatpush1.msra.mxu0 0.0
    %1046 = vmatprep.subr.mxu0 0.0
    %1047 = vmatpush1.msra.mxu0 0.0
    %1048 = vmatprep.subr.mxu0 0.0
    %1049 = vmatpush1.msra.mxu0 0.0
    %1050 = vmatprep.subr.mxu0 0.0
    %1051 = vmatpush1.msra.mxu0 0.0
    %1052 = vmatprep.subr.mxu0 0.0
    %1053 = vmatpush1.msra.mxu0 0.0
    %1054 = vmatprep.subr.mxu0 0.0
    %1055 = vmatpush1.msra.mxu0 0.0
    %1056 = vmatprep.subr.mxu0 0.0
    %1057 = vmatpush1.msra.mxu0 0.0
    %1058 = vmatprep.subr.mxu0 0.0
    %1059 = vmatpush1.msra.mxu0 0.0
    %1060 = vmatprep.subr.mxu0 0.0
    %1061 = vmatpush1.msra.mxu0 0.0
    %1062 = vmatprep.subr.mxu0 0.0
    %1063 = vmatpush1.msra.mxu0 0.0
    %1064 = vmatprep.subr.mxu0 0.0
    %1065 = vmatpush1.msra.mxu0 0.0
    %1066 = vmatprep.subr.mxu0 0.0
    %1067 = vmatpush1.msra.mxu0 0.0
    %1068 = vmatprep.subr.mxu0 0.0
    %1069 = vmatpush1.msra.mxu0 0.0
    %1070 = vmatprep.mubr.f32.mxu0 0.0
    %v1071 = vand.u32 %v58, 4294901760
    %v1072 = vsub.f32 %v58, %v1071
    %1073 = vmatmul.mubr.f32.gmra.mrb[0].mxu0 %v1072
    %v1074 = vpop.f32.mrb[0].mxu0
    %v1075 = vadd.f32 %v971, %v1074
    %v1076 = vpop.f32.mrb[0].mxu0
    %1077 = vdwg.mxu0
    %1078 = vmatprep.subr.mxu0 0.0
    %v1079 = vand.u32 %v716, 4294901760
    %1080 = vmatpush1.msra.mxu0 %v1079
    %1081 = vmatprep.subr.mxu0 0.0
    %v1082 = vand.u32 %v717, 4294901760
    %1083 = vmatpush1.msra.mxu0 %v1082
    %1084 = vmatprep.subr.mxu0 0.0
    %v1085 = vand.u32 %v718, 4294901760
    %1086 = vmatpush1.msra.mxu0 %v1085
    %1087 = vmatprep.subr.mxu0 0.0
    %v1088 = vand.u32 %v719, 4294901760
    %1089 = vmatpush1.msra.mxu0 %v1088
    %1090 = vmatprep.subr.mxu0 0.0
    %v1091 = vand.u32 %v720, 4294901760
    %1092 = vmatpush1.msra.mxu0 %v1091
    %1093 = vmatprep.subr.mxu0 0.0
    %v1094 = vand.u32 %v721, 4294901760
    %1095 = vmatpush1.msra.mxu0 %v1094
    %1096 = vmatprep.subr.mxu0 0.0
    %v1097 = vand.u32 %v722, 4294901760
    %1098 = vmatpush1.msra.mxu0 %v1097
    %1099 = vmatprep.subr.mxu0 0.0
    %v1100 = vand.u32 %v723, 4294901760
    %1101 = vmatpush1.msra.mxu0 %v1100
    %1102 = vmatprep.subr.mxu0 0.0
    %v1103 = vand.u32 %v724, 4294901760
    %1104 = vmatpush1.msra.mxu0 %v1103
    %1105 = vmatprep.subr.mxu0 0.0
    %v1106 = vand.u32 %v725, 4294901760
    %1107 = vmatpush1.msra.mxu0 %v1106
    %1108 = vmatprep.subr.mxu0 0.0
    %v1109 = vand.u32 %v726, 4294901760
    %1110 = vmatpush1.msra.mxu0 %v1109
    %1111 = vmatprep.subr.mxu0 0.0
    %v1112 = vand.u32 %v727, 4294901760
    %1113 = vmatpush1.msra.mxu0 %v1112
    %1114 = vmatprep.subr.mxu0 0.0
    %v1115 = vand.u32 %v728, 4294901760
    %1116 = vmatpush1.msra.mxu0 %v1115
    %1117 = vmatprep.subr.mxu0 0.0
    %v1118 = vand.u32 %v729, 4294901760
    %1119 = vmatpush1.msra.mxu0 %v1118
    %1120 = vmatprep.subr.mxu0 0.0
    %v1121 = vand.u32 %v730, 4294901760
    %1122 = vmatpush1.msra.mxu0 %v1121
    %1123 = vmatprep.subr.mxu0 0.0
    %v1124 = vand.u32 %v731, 4294901760
    %1125 = vmatpush1.msra.mxu0 %v1124
    %1126 = vmatprep.subr.mxu0 0.0
    %1127 = vmatpush1.msra.mxu0 0.0
    %1128 = vmatprep.subr.mxu0 0.0
    %1129 = vmatpush1.msra.mxu0 0.0
    %1130 = vmatprep.subr.mxu0 0.0
    %1131 = vmatpush1.msra.mxu0 0.0
    %1132 = vmatprep.subr.mxu0 0.0
    %1133 = vmatpush1.msra.mxu0 0.0
    %1134 = vmatprep.subr.mxu0 0.0
    %1135 = vmatpush1.msra.mxu0 0.0
    %1136 = vmatprep.subr.mxu0 0.0
    %1137 = vmatpush1.msra.mxu0 0.0
    %1138 = vmatprep.subr.mxu0 0.0
    %1139 = vmatpush1.msra.mxu0 0.0
    %1140 = vmatprep.subr.mxu0 0.0
    %1141 = vmatpush1.msra.mxu0 0.0
    %1142 = vmatprep.subr.mxu0 0.0
    %1143 = vmatpush1.msra.mxu0 0.0
    %1144 = vmatprep.subr.mxu0 0.0
    %1145 = vmatpush1.msra.mxu0 0.0
    %1146 = vmatprep.subr.mxu0 0.0
    %1147 = vmatpush1.msra.mxu0 0.0
    %1148 = vmatprep.subr.mxu0 0.0
    %1149 = vmatpush1.msra.mxu0 0.0
    %1150 = vmatprep.subr.mxu0 0.0
    %1151 = vmatpush1.msra.mxu0 0.0
    %1152 = vmatprep.subr.mxu0 0.0
    %1153 = vmatpush1.msra.mxu0 0.0
    %1154 = vmatprep.subr.mxu0 0.0
    %1155 = vmatpush1.msra.mxu0 0.0
    %1156 = vmatprep.subr.mxu0 0.0
    %1157 = vmatpush1.msra.mxu0 0.0
    %1158 = vmatprep.mubr.f32.mxu0 0.0
    %v1159 = vand.u32 %v58, 4294901760
    %v1160 = vsub.f32 %v58, %v1159
    %v1161 = vand.u32 %v1160, 4294901760
    %1162 = vmatmul.mubr.f32.gmra.mrb[0].mxu0 %v1161
    %v1163 = vpop.f32.mrb[0].mxu0
    %v1164 = vadd.f32 %v1075, %v1163
    %v1165 = vpop.f32.mrb[0].mxu0
    %1166 = vdwg.mxu0
    %1167 = vmatprep.subr.mxu0 0.0
    %v1168 = vand.u32 %v716, 4294901760
    %v1169 = vsub.f32 %v716, %v1168
    %v1170 = vand.u32 %v1169, 4294901760
    %1171 = vmatpush1.msra.mxu0 %v1170
    %1172 = vmatprep.subr.mxu0 0.0
    %v1173 = vand.u32 %v717, 4294901760
    %v1174 = vsub.f32 %v717, %v1173
    %v1175 = vand.u32 %v1174, 4294901760
    %1176 = vmatpush1.msra.mxu0 %v1175
    %1177 = vmatprep.subr.mxu0 0.0
    %v1178 = vand.u32 %v718, 4294901760
    %v1179 = vsub.f32 %v718, %v1178
    %v1180 = vand.u32 %v1179, 4294901760
    %1181 = vmatpush1.msra.mxu0 %v1180
    %1182 = vmatprep.subr.mxu0 0.0
    %v1183 = vand.u32 %v719, 4294901760
    %v1184 = vsub.f32 %v719, %v1183
    %v1185 = vand.u32 %v1184, 4294901760
    %1186 = vmatpush1.msra.mxu0 %v1185
    %1187 = vmatprep.subr.mxu0 0.0
    %v1188 = vand.u32 %v720, 4294901760
    %v1189 = vsub.f32 %v720, %v1188
    %v1190 = vand.u32 %v1189, 4294901760
    %1191 = vmatpush1.msra.mxu0 %v1190
    %1192 = vmatprep.subr.mxu0 0.0
    %v1193 = vand.u32 %v721, 4294901760
    %v1194 = vsub.f32 %v721, %v1193
    %v1195 = vand.u32 %v1194, 4294901760
    %1196 = vmatpush1.msra.mxu0 %v1195
    %1197 = vmatprep.subr.mxu0 0.0
    %v1198 = vand.u32 %v722, 4294901760
    %v1199 = vsub.f32 %v722, %v1198
    %v1200 = vand.u32 %v1199, 4294901760
    %1201 = vmatpush1.msra.mxu0 %v1200
    %1202 = vmatprep.subr.mxu0 0.0
    %v1203 = vand.u32 %v723, 4294901760
    %v1204 = vsub.f32 %v723, %v1203
    %v1205 = vand.u32 %v1204, 4294901760
    %1206 = vmatpush1.msra.mxu0 %v1205
    %1207 = vmatprep.subr.mxu0 0.0
    %v1208 = vand.u32 %v724, 4294901760
    %v1209 = vsub.f32 %v724, %v1208
    %v1210 = vand.u32 %v1209, 4294901760
    %1211 = vmatpush1.msra.mxu0 %v1210
    %1212 = vmatprep.subr.mxu0 0.0
    %v1213 = vand.u32 %v725, 4294901760
    %v1214 = vsub.f32 %v725, %v1213
    %v1215 = vand.u32 %v1214, 4294901760
    %1216 = vmatpush1.msra.mxu0 %v1215
    %1217 = vmatprep.subr.mxu0 0.0
    %v1218 = vand.u32 %v726, 4294901760
    %v1219 = vsub.f32 %v726, %v1218
    %v1220 = vand.u32 %v1219, 4294901760
    %1221 = vmatpush1.msra.mxu0 %v1220
    %1222 = vmatprep.subr.mxu0 0.0
    %v1223 = vand.u32 %v727, 4294901760
    %v1224 = vsub.f32 %v727, %v1223
    %v1225 = vand.u32 %v1224, 4294901760
    %1226 = vmatpush1.msra.mxu0 %v1225
    %1227 = vmatprep.subr.mxu0 0.0
    %v1228 = vand.u32 %v728, 4294901760
    %v1229 = vsub.f32 %v728, %v1228
    %v1230 = vand.u32 %v1229, 4294901760
    %1231 = vmatpush1.msra.mxu0 %v1230
    %1232 = vmatprep.subr.mxu0 0.0
    %v1233 = vand.u32 %v729, 4294901760
    %v1234 = vsub.f32 %v729, %v1233
    %v1235 = vand.u32 %v1234, 4294901760
    %1236 = vmatpush1.msra.mxu0 %v1235
    %1237 = vmatprep.subr.mxu0 0.0
    %v1238 = vand.u32 %v730, 4294901760
    %v1239 = vsub.f32 %v730, %v1238
    %v1240 = vand.u32 %v1239, 4294901760
    %1241 = vmatpush1.msra.mxu0 %v1240
    %1242 = vmatprep.subr.mxu0 0.0
    %v1243 = vand.u32 %v731, 4294901760
    %v1244 = vsub.f32 %v731, %v1243
    %v1245 = vand.u32 %v1244, 4294901760
    %1246 = vmatpush1.msra.mxu0 %v1245
    %1247 = vmatprep.subr.mxu0 0.0
    %1248 = vmatpush1.msra.mxu0 0.0
    %1249 = vmatprep.subr.mxu0 0.0
    %1250 = vmatpush1.msra.mxu0 0.0
    %1251 = vmatprep.subr.mxu0 0.0
    %1252 = vmatpush1.msra.mxu0 0.0
    %1253 = vmatprep.subr.mxu0 0.0
    %1254 = vmatpush1.msra.mxu0 0.0
    %1255 = vmatprep.subr.mxu0 0.0
    %1256 = vmatpush1.msra.mxu0 0.0
    %1257 = vmatprep.subr.mxu0 0.0
    %1258 = vmatpush1.msra.mxu0 0.0
    %1259 = vmatprep.subr.mxu0 0.0
    %1260 = vmatpush1.msra.mxu0 0.0
    %1261 = vmatprep.subr.mxu0 0.0
    %1262 = vmatpush1.msra.mxu0 0.0
    %1263 = vmatprep.subr.mxu0 0.0
    %1264 = vmatpush1.msra.mxu0 0.0
    %1265 = vmatprep.subr.mxu0 0.0
    %1266 = vmatpush1.msra.mxu0 0.0
    %1267 = vmatprep.subr.mxu0 0.0
    %1268 = vmatpush1.msra.mxu0 0.0
    %1269 = vmatprep.subr.mxu0 0.0
    %1270 = vmatpush1.msra.mxu0 0.0
    %1271 = vmatprep.subr.mxu0 0.0
    %1272 = vmatpush1.msra.mxu0 0.0
    %1273 = vmatprep.subr.mxu0 0.0
    %1274 = vmatpush1.msra.mxu0 0.0
    %1275 = vmatprep.subr.mxu0 0.0
    %1276 = vmatpush1.msra.mxu0 0.0
    %1277 = vmatprep.subr.mxu0 0.0
    %1278 = vmatpush1.msra.mxu0 0.0
    %1279 = vmatprep.mubr.f32.mxu0 0.0
    %v1280 = vand.u32 %v58, 4294901760
    %1281 = vmatmul.mubr.f32.gmra.mrb[0].mxu0 %v1280
    %v1282 = vpop.f32.mrb[0].mxu0
    %v1283 = vadd.f32 %v1164, %v1282
    %v1284 = vpop.f32.mrb[0].mxu0
    %1285 = vdwg.mxu0
    %1286 = vmatprep.subr.mxu0 0.0
    %v1287 = vand.u32 %v716, 4294901760
    %1288 = vmatpush1.msra.mxu0 %v1287
    %1289 = vmatprep.subr.mxu0 0.0
    %v1290 = vand.u32 %v717, 4294901760
    %1291 = vmatpush1.msra.mxu0 %v1290
    %1292 = vmatprep.subr.mxu0 0.0
    %v1293 = vand.u32 %v718, 4294901760
    %1294 = vmatpush1.msra.mxu0 %v1293
    %1295 = vmatprep.subr.mxu0 0.0
    %v1296 = vand.u32 %v719, 4294901760
    %1297 = vmatpush1.msra.mxu0 %v1296
    %1298 = vmatprep.subr.mxu0 0.0
    %v1299 = vand.u32 %v720, 4294901760
    %1300 = vmatpush1.msra.mxu0 %v1299
    %1301 = vmatprep.subr.mxu0 0.0
    %v1302 = vand.u32 %v721, 4294901760
    %1303 = vmatpush1.msra.mxu0 %v1302
    %1304 = vmatprep.subr.mxu0 0.0
    %v1305 = vand.u32 %v722, 4294901760
    %1306 = vmatpush1.msra.mxu0 %v1305
    %1307 = vmatprep.subr.mxu0 0.0
    %v1308 = vand.u32 %v723, 4294901760
    %1309 = vmatpush1.msra.mxu0 %v1308
    %1310 = vmatprep.subr.mxu0 0.0
    %v1311 = vand.u32 %v724, 4294901760
    %1312 = vmatpush1.msra.mxu0 %v1311
    %1313 = vmatprep.subr.mxu0 0.0
    %v1314 = vand.u32 %v725, 4294901760
    %1315 = vmatpush1.msra.mxu0 %v1314
    %1316 = vmatprep.subr.mxu0 0.0
    %v1317 = vand.u32 %v726, 4294901760
    %1318 = vmatpush1.msra.mxu0 %v1317
    %1319 = vmatprep.subr.mxu0 0.0
    %v1320 = vand.u32 %v727, 4294901760
    %1321 = vmatpush1.msra.mxu0 %v1320
    %1322 = vmatprep.subr.mxu0 0.0
    %v1323 = vand.u32 %v728, 4294901760
    %1324 = vmatpush1.msra.mxu0 %v1323
    %1325 = vmatprep.subr.mxu0 0.0
    %v1326 = vand.u32 %v729, 4294901760
    %1327 = vmatpush1.msra.mxu0 %v1326
    %1328 = vmatprep.subr.mxu0 0.0
    %v1329 = vand.u32 %v730, 4294901760
    %1330 = vmatpush1.msra.mxu0 %v1329
    %1331 = vmatprep.subr.mxu0 0.0
    %v1332 = vand.u32 %v731, 4294901760
    %1333 = vmatpush1.msra.mxu0 %v1332
    %1334 = vmatprep.subr.mxu0 0.0
    %1335 = vmatpush1.msra.mxu0 0.0
    %1336 = vmatprep.subr.mxu0 0.0
    %1337 = vmatpush1.msra.mxu0 0.0
    %1338 = vmatprep.subr.mxu0 0.0
    %1339 = vmatpush1.msra.mxu0 0.0
    %1340 = vmatprep.subr.mxu0 0.0
    %1341 = vmatpush1.msra.mxu0 0.0
    %1342 = vmatprep.subr.mxu0 0.0
    %1343 = vmatpush1.msra.mxu0 0.0
    %1344 = vmatprep.subr.mxu0 0.0
    %1345 = vmatpush1.msra.mxu0 0.0
    %1346 = vmatprep.subr.mxu0 0.0
    %1347 = vmatpush1.msra.mxu0 0.0
    %1348 = vmatprep.subr.mxu0 0.0
    %1349 = vmatpush1.msra.mxu0 0.0
    %1350 = vmatprep.subr.mxu0 0.0
    %1351 = vmatpush1.msra.mxu0 0.0
    %1352 = vmatprep.subr.mxu0 0.0
    %1353 = vmatpush1.msra.mxu0 0.0
    %1354 = vmatprep.subr.mxu0 0.0
    %1355 = vmatpush1.msra.mxu0 0.0
    %1356 = vmatprep.subr.mxu0 0.0
    %1357 = vmatpush1.msra.mxu0 0.0
    %1358 = vmatprep.subr.mxu0 0.0
    %1359 = vmatpush1.msra.mxu0 0.0
    %1360 = vmatprep.subr.mxu0 0.0
    %1361 = vmatpush1.msra.mxu0 0.0
    %1362 = vmatprep.subr.mxu0 0.0
    %1363 = vmatpush1.msra.mxu0 0.0
    %1364 = vmatprep.subr.mxu0 0.0
    %1365 = vmatpush1.msra.mxu0 0.0
    %1366 = vmatprep.mubr.f32.mxu0 0.0
    %v1367 = vand.u32 %v58, 4294901760
    %1368 = vmatmul.mubr.f32.gmra.mrb[0].mxu0 %v1367
    %v1369 = vpop.f32.mrb[0].mxu0
    %v1370 = vadd.f32 %v1283, %v1369
    %v1371 = vpop.f32.mrb[0].mxu0
    %1372 = vdwg.mxu0
    %v1373 = vmax.f32 %v713, %v1370
    %1375 = vrot.lane.b32.xlu0 %v1373, 64
    %v1376 = vpop.permute.xlu0 %1375
    %v1378 = vmax.f32 %v1373, %v1376
    %v1379 = vld [vmem:[%s3] sm:$0x1]
    %v1381 = vlaneseq
    %v1382 = vshrl.u32 %v1381, 7
    %v1383 = vsub.s32 0, %v1382
    %v1384 = vrot.slane %v1379, %v1383
    %v1386 = vadd.f32 %v1378, %v1384
    %v1387 = vmax.f32 %v1386, 0.0
    %v1388 = vld [vmem:[%s4] sm:$0xff]
    %v1389 = vld [vmem:[%s4 + $0x8] sm:$0xff]
    %v1390 = vld [vmem:[%s4 + $0x10] sm:$0xff]
    %v1391 = vld [vmem:[%s4 + $0x18] sm:$0xff]
    %v1392 = vld [vmem:[%s4 + $0x20] sm:$0xff]
    %v1393 = vld [vmem:[%s4 + $0x28] sm:$0xff]
    %v1394 = vld [vmem:[%s4 + $0x30] sm:$0xff]
    %v1395 = vld [vmem:[%s4 + $0x38] sm:$0xff]
    %v1396 = vld [vmem:[%s5] sm:$0x1]
    %v1398 = vlaneseq
    %v1399 = vshrl.u32 %v1398, 7
    %v1400 = vsub.s32 0, %v1399
    %v1401 = vrot.slane %v1396, %v1400
    %vm1403 = vcmask 523264
    %v1405 = vsel %vm1403, %v1387, 0
    %1407 = vmatprep.subr.mxu0 0.0
    %v1408 = vand.u32 %v1388, 4294901760
    %1409 = vmatpush1.msra.mxu0 %v1408
    %1410 = vmatprep.subr.mxu0 0.0
    %v1411 = vand.u32 %v1389, 4294901760
    %1412 = vmatpush1.msra.mxu0 %v1411
    %1413 = vmatprep.subr.mxu0 0.0
    %v1414 = vand.u32 %v1390, 4294901760
    %1415 = vmatpush1.msra.mxu0 %v1414
    %1416 = vmatprep.subr.mxu0 0.0
    %v1417 = vand.u32 %v1391, 4294901760
    %1418 = vmatpush1.msra.mxu0 %v1417
    %1419 = vmatprep.subr.mxu0 0.0
    %v1420 = vand.u32 %v1392, 4294901760
    %1421 = vmatpush1.msra.mxu0 %v1420
    %1422 = vmatprep.subr.mxu0 0.0
    %v1423 = vand.u32 %v1393, 4294901760
    %1424 = vmatpush1.msra.mxu0 %v1423
    %1425 = vmatprep.subr.mxu0 0.0
    %v1426 = vand.u32 %v1394, 4294901760
    %1427 = vmatpush1.msra.mxu0 %v1426
    %1428 = vmatprep.subr.mxu0 0.0
    %v1429 = vand.u32 %v1395, 4294901760
    %1430 = vmatpush1.msra.mxu0 %v1429
    %1431 = vmatprep.subr.mxu0 0.0
    %1432 = vmatpush1.msra.mxu0 0.0
    %1433 = vmatprep.subr.mxu0 0.0
    %1434 = vmatpush1.msra.mxu0 0.0
    %1435 = vmatprep.subr.mxu0 0.0
    %1436 = vmatpush1.msra.mxu0 0.0
    %1437 = vmatprep.subr.mxu0 0.0
    %1438 = vmatpush1.msra.mxu0 0.0
    %1439 = vmatprep.subr.mxu0 0.0
    %1440 = vmatpush1.msra.mxu0 0.0
    %1441 = vmatprep.subr.mxu0 0.0
    %1442 = vmatpush1.msra.mxu0 0.0
    %1443 = vmatprep.subr.mxu0 0.0
    %1444 = vmatpush1.msra.mxu0 0.0
    %1445 = vmatprep.subr.mxu0 0.0
    %1446 = vmatpush1.msra.mxu0 0.0
    %1447 = vmatprep.subr.mxu0 0.0
    %1448 = vmatpush1.msra.mxu0 0.0
    %1449 = vmatprep.subr.mxu0 0.0
    %1450 = vmatpush1.msra.mxu0 0.0
    %1451 = vmatprep.subr.mxu0 0.0
    %1452 = vmatpush1.msra.mxu0 0.0
    %1453 = vmatprep.subr.mxu0 0.0
    %1454 = vmatpush1.msra.mxu0 0.0
    %1455 = vmatprep.subr.mxu0 0.0
    %1456 = vmatpush1.msra.mxu0 0.0
    %1457 = vmatprep.subr.mxu0 0.0
    %1458 = vmatpush1.msra.mxu0 0.0
    %1459 = vmatprep.subr.mxu0 0.0
    %1460 = vmatpush1.msra.mxu0 0.0
    %1461 = vmatprep.subr.mxu0 0.0
    %1462 = vmatpush1.msra.mxu0 0.0
    %1463 = vmatprep.subr.mxu0 0.0
    %1464 = vmatpush1.msra.mxu0 0.0
    %1465 = vmatprep.subr.mxu0 0.0
    %1466 = vmatpush1.msra.mxu0 0.0
    %1467 = vmatprep.subr.mxu0 0.0
    %1468 = vmatpush1.msra.mxu0 0.0
    %1469 = vmatprep.subr.mxu0 0.0
    %1470 = vmatpush1.msra.mxu0 0.0
    %1471 = vmatprep.subr.mxu0 0.0
    %1472 = vmatpush1.msra.mxu0 0.0
    %1473 = vmatprep.subr.mxu0 0.0
    %1474 = vmatpush1.msra.mxu0 0.0
    %1475 = vmatprep.subr.mxu0 0.0
    %1476 = vmatpush1.msra.mxu0 0.0
    %1477 = vmatprep.subr.mxu0 0.0
    %1478 = vmatpush1.msra.mxu0 0.0
    %1479 = vmatprep.mubr.f32.mxu0 0.0
    %v1480 = vand.u32 %v1405, 4294901760
    %v1481 = vsub.f32 %v1405, %v1480
    %v1482 = vand.u32 %v1481, 4294901760
    %v1483 = vsub.f32 %v1481, %v1482
    %v1484 = vand.u32 %v1483, 4294901760
    %1485 = vmatmul.mubr.f32.gmra.mrb[0].mxu0 %v1484
    %v1486 = vpop.f32.mrb[0].mxu0
    %v1487 = vadd.f32 %v1401, %v1486
    %v1488 = vpop.f32.mrb[0].mxu0
    %1489 = vdwg.mxu0
    %1490 = vmatprep.subr.mxu0 0.0
    %v1491 = vand.u32 %v1388, 4294901760
    %v1492 = vsub.f32 %v1388, %v1491
    %v1493 = vand.u32 %v1492, 4294901760
    %v1494 = vsub.f32 %v1492, %v1493
    %v1495 = vand.u32 %v1494, 4294901760
    %1496 = vmatpush1.msra.mxu0 %v1495
    %1497 = vmatprep.subr.mxu0 0.0
    %v1498 = vand.u32 %v1389, 4294901760
    %v1499 = vsub.f32 %v1389, %v1498
    %v1500 = vand.u32 %v1499, 4294901760
    %v1501 = vsub.f32 %v1499, %v1500
    %v1502 = vand.u32 %v1501, 4294901760
    %1503 = vmatpush1.msra.mxu0 %v1502
    %1504 = vmatprep.subr.mxu0 0.0
    %v1505 = vand.u32 %v1390, 4294901760
    %v1506 = vsub.f32 %v1390, %v1505
    %v1507 = vand.u32 %v1506, 4294901760
    %v1508 = vsub.f32 %v1506, %v1507
    %v1509 = vand.u32 %v1508, 4294901760
    %1510 = vmatpush1.msra.mxu0 %v1509
    %1511 = vmatprep.subr.mxu0 0.0
    %v1512 = vand.u32 %v1391, 4294901760
    %v1513 = vsub.f32 %v1391, %v1512
    %v1514 = vand.u32 %v1513, 4294901760
    %v1515 = vsub.f32 %v1513, %v1514
    %v1516 = vand.u32 %v1515, 4294901760
    %1517 = vmatpush1.msra.mxu0 %v1516
    %1518 = vmatprep.subr.mxu0 0.0
    %v1519 = vand.u32 %v1392, 4294901760
    %v1520 = vsub.f32 %v1392, %v1519
    %v1521 = vand.u32 %v1520, 4294901760
    %v1522 = vsub.f32 %v1520, %v1521
    %v1523 = vand.u32 %v1522, 4294901760
    %1524 = vmatpush1.msra.mxu0 %v1523
    %1525 = vmatprep.subr.mxu0 0.0
    %v1526 = vand.u32 %v1393, 4294901760
    %v1527 = vsub.f32 %v1393, %v1526
    %v1528 = vand.u32 %v1527, 4294901760
    %v1529 = vsub.f32 %v1527, %v1528
    %v1530 = vand.u32 %v1529, 4294901760
    %1531 = vmatpush1.msra.mxu0 %v1530
    %1532 = vmatprep.subr.mxu0 0.0
    %v1533 = vand.u32 %v1394, 4294901760
    %v1534 = vsub.f32 %v1394, %v1533
    %v1535 = vand.u32 %v1534, 4294901760
    %v1536 = vsub.f32 %v1534, %v1535
    %v1537 = vand.u32 %v1536, 4294901760
    %1538 = vmatpush1.msra.mxu0 %v1537
    %1539 = vmatprep.subr.mxu0 0.0
    %v1540 = vand.u32 %v1395, 4294901760
    %v1541 = vsub.f32 %v1395, %v1540
    %v1542 = vand.u32 %v1541, 4294901760
    %v1543 = vsub.f32 %v1541, %v1542
    %v1544 = vand.u32 %v1543, 4294901760
    %1545 = vmatpush1.msra.mxu0 %v1544
    %1546 = vmatprep.subr.mxu0 0.0
    %1547 = vmatpush1.msra.mxu0 0.0
    %1548 = vmatprep.subr.mxu0 0.0
    %1549 = vmatpush1.msra.mxu0 0.0
    %1550 = vmatprep.subr.mxu0 0.0
    %1551 = vmatpush1.msra.mxu0 0.0
    %1552 = vmatprep.subr.mxu0 0.0
    %1553 = vmatpush1.msra.mxu0 0.0
    %1554 = vmatprep.subr.mxu0 0.0
    %1555 = vmatpush1.msra.mxu0 0.0
    %1556 = vmatprep.subr.mxu0 0.0
    %1557 = vmatpush1.msra.mxu0 0.0
    %1558 = vmatprep.subr.mxu0 0.0
    %1559 = vmatpush1.msra.mxu0 0.0
    %1560 = vmatprep.subr.mxu0 0.0
    %1561 = vmatpush1.msra.mxu0 0.0
    %1562 = vmatprep.subr.mxu0 0.0
    %1563 = vmatpush1.msra.mxu0 0.0
    %1564 = vmatprep.subr.mxu0 0.0
    %1565 = vmatpush1.msra.mxu0 0.0
    %1566 = vmatprep.subr.mxu0 0.0
    %1567 = vmatpush1.msra.mxu0 0.0
    %1568 = vmatprep.subr.mxu0 0.0
    %1569 = vmatpush1.msra.mxu0 0.0
    %1570 = vmatprep.subr.mxu0 0.0
    %1571 = vmatpush1.msra.mxu0 0.0
    %1572 = vmatprep.subr.mxu0 0.0
    %1573 = vmatpush1.msra.mxu0 0.0
    %1574 = vmatprep.subr.mxu0 0.0
    %1575 = vmatpush1.msra.mxu0 0.0
    %1576 = vmatprep.subr.mxu0 0.0
    %1577 = vmatpush1.msra.mxu0 0.0
    %1578 = vmatprep.subr.mxu0 0.0
    %1579 = vmatpush1.msra.mxu0 0.0
    %1580 = vmatprep.subr.mxu0 0.0
    %1581 = vmatpush1.msra.mxu0 0.0
    %1582 = vmatprep.subr.mxu0 0.0
    %1583 = vmatpush1.msra.mxu0 0.0
    %1584 = vmatprep.subr.mxu0 0.0
    %1585 = vmatpush1.msra.mxu0 0.0
    %1586 = vmatprep.subr.mxu0 0.0
    %1587 = vmatpush1.msra.mxu0 0.0
    %1588 = vmatprep.subr.mxu0 0.0
    %1589 = vmatpush1.msra.mxu0 0.0
    %1590 = vmatprep.subr.mxu0 0.0
    %1591 = vmatpush1.msra.mxu0 0.0
    %1592 = vmatprep.subr.mxu0 0.0
    %1593 = vmatpush1.msra.mxu0 0.0
    %1594 = vmatprep.mubr.f32.mxu0 0.0
    %v1595 = vand.u32 %v1405, 4294901760
    %1596 = vmatmul.mubr.f32.gmra.mrb[0].mxu0 %v1595
    %v1597 = vpop.f32.mrb[0].mxu0
    %v1598 = vadd.f32 %v1487, %v1597
    %v1599 = vpop.f32.mrb[0].mxu0
    %1600 = vdwg.mxu0
    %1601 = vmatprep.subr.mxu0 0.0
    %v1602 = vand.u32 %v1388, 4294901760
    %v1603 = vsub.f32 %v1388, %v1602
    %1604 = vmatpush1.msra.mxu0 %v1603
    %1605 = vmatprep.subr.mxu0 0.0
    %v1606 = vand.u32 %v1389, 4294901760
    %v1607 = vsub.f32 %v1389, %v1606
    %1608 = vmatpush1.msra.mxu0 %v1607
    %1609 = vmatprep.subr.mxu0 0.0
    %v1610 = vand.u32 %v1390, 4294901760
    %v1611 = vsub.f32 %v1390, %v1610
    %1612 = vmatpush1.msra.mxu0 %v1611
    %1613 = vmatprep.subr.mxu0 0.0
    %v1614 = vand.u32 %v1391, 4294901760
    %v1615 = vsub.f32 %v1391, %v1614
    %1616 = vmatpush1.msra.mxu0 %v1615
    %1617 = vmatprep.subr.mxu0 0.0
    %v1618 = vand.u32 %v1392, 4294901760
    %v1619 = vsub.f32 %v1392, %v1618
    %1620 = vmatpush1.msra.mxu0 %v1619
    %1621 = vmatprep.subr.mxu0 0.0
    %v1622 = vand.u32 %v1393, 4294901760
    %v1623 = vsub.f32 %v1393, %v1622
    %1624 = vmatpush1.msra.mxu0 %v1623
    %1625 = vmatprep.subr.mxu0 0.0
    %v1626 = vand.u32 %v1394, 4294901760
    %v1627 = vsub.f32 %v1394, %v1626
    %1628 = vmatpush1.msra.mxu0 %v1627
    %1629 = vmatprep.subr.mxu0 0.0
    %v1630 = vand.u32 %v1395, 4294901760
    %v1631 = vsub.f32 %v1395, %v1630
    %1632 = vmatpush1.msra.mxu0 %v1631
    %1633 = vmatprep.subr.mxu0 0.0
    %1634 = vmatpush1.msra.mxu0 0.0
    %1635 = vmatprep.subr.mxu0 0.0
    %1636 = vmatpush1.msra.mxu0 0.0
    %1637 = vmatprep.subr.mxu0 0.0
    %1638 = vmatpush1.msra.mxu0 0.0
    %1639 = vmatprep.subr.mxu0 0.0
    %1640 = vmatpush1.msra.mxu0 0.0
    %1641 = vmatprep.subr.mxu0 0.0
    %1642 = vmatpush1.msra.mxu0 0.0
    %1643 = vmatprep.subr.mxu0 0.0
    %1644 = vmatpush1.msra.mxu0 0.0
    %1645 = vmatprep.subr.mxu0 0.0
    %1646 = vmatpush1.msra.mxu0 0.0
    %1647 = vmatprep.subr.mxu0 0.0
    %1648 = vmatpush1.msra.mxu0 0.0
    %1649 = vmatprep.subr.mxu0 0.0
    %1650 = vmatpush1.msra.mxu0 0.0
    %1651 = vmatprep.subr.mxu0 0.0
    %1652 = vmatpush1.msra.mxu0 0.0
    %1653 = vmatprep.subr.mxu0 0.0
    %1654 = vmatpush1.msra.mxu0 0.0
    %1655 = vmatprep.subr.mxu0 0.0
    %1656 = vmatpush1.msra.mxu0 0.0
    %1657 = vmatprep.subr.mxu0 0.0
    %1658 = vmatpush1.msra.mxu0 0.0
    %1659 = vmatprep.subr.mxu0 0.0
    %1660 = vmatpush1.msra.mxu0 0.0
    %1661 = vmatprep.subr.mxu0 0.0
    %1662 = vmatpush1.msra.mxu0 0.0
    %1663 = vmatprep.subr.mxu0 0.0
    %1664 = vmatpush1.msra.mxu0 0.0
    %1665 = vmatprep.subr.mxu0 0.0
    %1666 = vmatpush1.msra.mxu0 0.0
    %1667 = vmatprep.subr.mxu0 0.0
    %1668 = vmatpush1.msra.mxu0 0.0
    %1669 = vmatprep.subr.mxu0 0.0
    %1670 = vmatpush1.msra.mxu0 0.0
    %1671 = vmatprep.subr.mxu0 0.0
    %1672 = vmatpush1.msra.mxu0 0.0
    %1673 = vmatprep.subr.mxu0 0.0
    %1674 = vmatpush1.msra.mxu0 0.0
    %1675 = vmatprep.subr.mxu0 0.0
    %1676 = vmatpush1.msra.mxu0 0.0
    %1677 = vmatprep.subr.mxu0 0.0
    %1678 = vmatpush1.msra.mxu0 0.0
    %1679 = vmatprep.subr.mxu0 0.0
    %1680 = vmatpush1.msra.mxu0 0.0
    %1681 = vmatprep.mubr.f32.mxu0 0.0
    %v1682 = vand.u32 %v1405, 4294901760
    %v1683 = vsub.f32 %v1405, %v1682
    %1684 = vmatmul.mubr.f32.gmra.mrb[0].mxu0 %v1683
    %v1685 = vpop.f32.mrb[0].mxu0
    %v1686 = vadd.f32 %v1598, %v1685
    %v1687 = vpop.f32.mrb[0].mxu0
    %1688 = vdwg.mxu0
    %1689 = vmatprep.subr.mxu0 0.0
    %v1690 = vand.u32 %v1388, 4294901760
    %1691 = vmatpush1.msra.mxu0 %v1690
    %1692 = vmatprep.subr.mxu0 0.0
    %v1693 = vand.u32 %v1389, 4294901760
    %1694 = vmatpush1.msra.mxu0 %v1693
    %1695 = vmatprep.subr.mxu0 0.0
    %v1696 = vand.u32 %v1390, 4294901760
    %1697 = vmatpush1.msra.mxu0 %v1696
    %1698 = vmatprep.subr.mxu0 0.0
    %v1699 = vand.u32 %v1391, 4294901760
    %1700 = vmatpush1.msra.mxu0 %v1699
    %1701 = vmatprep.subr.mxu0 0.0
    %v1702 = vand.u32 %v1392, 4294901760
    %1703 = vmatpush1.msra.mxu0 %v1702
    %1704 = vmatprep.subr.mxu0 0.0
    %v1705 = vand.u32 %v1393, 4294901760
    %1706 = vmatpush1.msra.mxu0 %v1705
    %1707 = vmatprep.subr.mxu0 0.0
    %v1708 = vand.u32 %v1394, 4294901760
    %1709 = vmatpush1.msra.mxu0 %v1708
    %1710 = vmatprep.subr.mxu0 0.0
    %v1711 = vand.u32 %v1395, 4294901760
    %1712 = vmatpush1.msra.mxu0 %v1711
    %1713 = vmatprep.subr.mxu0 0.0
    %1714 = vmatpush1.msra.mxu0 0.0
    %1715 = vmatprep.subr.mxu0 0.0
    %1716 = vmatpush1.msra.mxu0 0.0
    %1717 = vmatprep.subr.mxu0 0.0
    %1718 = vmatpush1.msra.mxu0 0.0
    %1719 = vmatprep.subr.mxu0 0.0
    %1720 = vmatpush1.msra.mxu0 0.0
    %1721 = vmatprep.subr.mxu0 0.0
    %1722 = vmatpush1.msra.mxu0 0.0
    %1723 = vmatprep.subr.mxu0 0.0
    %1724 = vmatpush1.msra.mxu0 0.0
    %1725 = vmatprep.subr.mxu0 0.0
    %1726 = vmatpush1.msra.mxu0 0.0
    %1727 = vmatprep.subr.mxu0 0.0
    %1728 = vmatpush1.msra.mxu0 0.0
    %1729 = vmatprep.subr.mxu0 0.0
    %1730 = vmatpush1.msra.mxu0 0.0
    %1731 = vmatprep.subr.mxu0 0.0
    %1732 = vmatpush1.msra.mxu0 0.0
    %1733 = vmatprep.subr.mxu0 0.0
    %1734 = vmatpush1.msra.mxu0 0.0
    %1735 = vmatprep.subr.mxu0 0.0
    %1736 = vmatpush1.msra.mxu0 0.0
    %1737 = vmatprep.subr.mxu0 0.0
    %1738 = vmatpush1.msra.mxu0 0.0
    %1739 = vmatprep.subr.mxu0 0.0
    %1740 = vmatpush1.msra.mxu0 0.0
    %1741 = vmatprep.subr.mxu0 0.0
    %1742 = vmatpush1.msra.mxu0 0.0
    %1743 = vmatprep.subr.mxu0 0.0
    %1744 = vmatpush1.msra.mxu0 0.0
    %1745 = vmatprep.subr.mxu0 0.0
    %1746 = vmatpush1.msra.mxu0 0.0
    %1747 = vmatprep.subr.mxu0 0.0
    %1748 = vmatpush1.msra.mxu0 0.0
    %1749 = vmatprep.subr.mxu0 0.0
    %1750 = vmatpush1.msra.mxu0 0.0
    %1751 = vmatprep.subr.mxu0 0.0
    %1752 = vmatpush1.msra.mxu0 0.0
    %1753 = vmatprep.subr.mxu0 0.0
    %1754 = vmatpush1.msra.mxu0 0.0
    %1755 = vmatprep.subr.mxu0 0.0
    %1756 = vmatpush1.msra.mxu0 0.0
    %1757 = vmatprep.subr.mxu0 0.0
    %1758 = vmatpush1.msra.mxu0 0.0
    %1759 = vmatprep.subr.mxu0 0.0
    %1760 = vmatpush1.msra.mxu0 0.0
    %1761 = vmatprep.mubr.f32.mxu0 0.0
    %v1762 = vand.u32 %v1405, 4294901760
    %v1763 = vsub.f32 %v1405, %v1762
    %v1764 = vand.u32 %v1763, 4294901760
    %1765 = vmatmul.mubr.f32.gmra.mrb[0].mxu0 %v1764
    %v1766 = vpop.f32.mrb[0].mxu0
    %v1767 = vadd.f32 %v1686, %v1766
    %v1768 = vpop.f32.mrb[0].mxu0
    %1769 = vdwg.mxu0
    %1770 = vmatprep.subr.mxu0 0.0
    %v1771 = vand.u32 %v1388, 4294901760
    %v1772 = vsub.f32 %v1388, %v1771
    %v1773 = vand.u32 %v1772, 4294901760
    %1774 = vmatpush1.msra.mxu0 %v1773
    %1775 = vmatprep.subr.mxu0 0.0
    %v1776 = vand.u32 %v1389, 4294901760
    %v1777 = vsub.f32 %v1389, %v1776
    %v1778 = vand.u32 %v1777, 4294901760
    %1779 = vmatpush1.msra.mxu0 %v1778
    %1780 = vmatprep.subr.mxu0 0.0
    %v1781 = vand.u32 %v1390, 4294901760
    %v1782 = vsub.f32 %v1390, %v1781
    %v1783 = vand.u32 %v1782, 4294901760
    %1784 = vmatpush1.msra.mxu0 %v1783
    %1785 = vmatprep.subr.mxu0 0.0
    %v1786 = vand.u32 %v1391, 4294901760
    %v1787 = vsub.f32 %v1391, %v1786
    %v1788 = vand.u32 %v1787, 4294901760
    %1789 = vmatpush1.msra.mxu0 %v1788
    %1790 = vmatprep.subr.mxu0 0.0
    %v1791 = vand.u32 %v1392, 4294901760
    %v1792 = vsub.f32 %v1392, %v1791
    %v1793 = vand.u32 %v1792, 4294901760
    %1794 = vmatpush1.msra.mxu0 %v1793
    %1795 = vmatprep.subr.mxu0 0.0
    %v1796 = vand.u32 %v1393, 4294901760
    %v1797 = vsub.f32 %v1393, %v1796
    %v1798 = vand.u32 %v1797, 4294901760
    %1799 = vmatpush1.msra.mxu0 %v1798
    %1800 = vmatprep.subr.mxu0 0.0
    %v1801 = vand.u32 %v1394, 4294901760
    %v1802 = vsub.f32 %v1394, %v1801
    %v1803 = vand.u32 %v1802, 4294901760
    %1804 = vmatpush1.msra.mxu0 %v1803
    %1805 = vmatprep.subr.mxu0 0.0
    %v1806 = vand.u32 %v1395, 4294901760
    %v1807 = vsub.f32 %v1395, %v1806
    %v1808 = vand.u32 %v1807, 4294901760
    %1809 = vmatpush1.msra.mxu0 %v1808
    %1810 = vmatprep.subr.mxu0 0.0
    %1811 = vmatpush1.msra.mxu0 0.0
    %1812 = vmatprep.subr.mxu0 0.0
    %1813 = vmatpush1.msra.mxu0 0.0
    %1814 = vmatprep.subr.mxu0 0.0
    %1815 = vmatpush1.msra.mxu0 0.0
    %1816 = vmatprep.subr.mxu0 0.0
    %1817 = vmatpush1.msra.mxu0 0.0
    %1818 = vmatprep.subr.mxu0 0.0
    %1819 = vmatpush1.msra.mxu0 0.0
    %1820 = vmatprep.subr.mxu0 0.0
    %1821 = vmatpush1.msra.mxu0 0.0
    %1822 = vmatprep.subr.mxu0 0.0
    %1823 = vmatpush1.msra.mxu0 0.0
    %1824 = vmatprep.subr.mxu0 0.0
    %1825 = vmatpush1.msra.mxu0 0.0
    %1826 = vmatprep.subr.mxu0 0.0
    %1827 = vmatpush1.msra.mxu0 0.0
    %1828 = vmatprep.subr.mxu0 0.0
    %1829 = vmatpush1.msra.mxu0 0.0
    %1830 = vmatprep.subr.mxu0 0.0
    %1831 = vmatpush1.msra.mxu0 0.0
    %1832 = vmatprep.subr.mxu0 0.0
    %1833 = vmatpush1.msra.mxu0 0.0
    %1834 = vmatprep.subr.mxu0 0.0
    %1835 = vmatpush1.msra.mxu0 0.0
    %1836 = vmatprep.subr.mxu0 0.0
    %1837 = vmatpush1.msra.mxu0 0.0
    %1838 = vmatprep.subr.mxu0 0.0
    %1839 = vmatpush1.msra.mxu0 0.0
    %1840 = vmatprep.subr.mxu0 0.0
    %1841 = vmatpush1.msra.mxu0 0.0
    %1842 = vmatprep.subr.mxu0 0.0
    %1843 = vmatpush1.msra.mxu0 0.0
    %1844 = vmatprep.subr.mxu0 0.0
    %1845 = vmatpush1.msra.mxu0 0.0
    %1846 = vmatprep.subr.mxu0 0.0
    %1847 = vmatpush1.msra.mxu0 0.0
    %1848 = vmatprep.subr.mxu0 0.0
    %1849 = vmatpush1.msra.mxu0 0.0
    %1850 = vmatprep.subr.mxu0 0.0
    %1851 = vmatpush1.msra.mxu0 0.0
    %1852 = vmatprep.subr.mxu0 0.0
    %1853 = vmatpush1.msra.mxu0 0.0
    %1854 = vmatprep.subr.mxu0 0.0
    %1855 = vmatpush1.msra.mxu0 0.0
    %1856 = vmatprep.subr.mxu0 0.0
    %1857 = vmatpush1.msra.mxu0 0.0
    %1858 = vmatprep.mubr.f32.mxu0 0.0
    %v1859 = vand.u32 %v1405, 4294901760
    %1860 = vmatmul.mubr.f32.gmra.mrb[0].mxu0 %v1859
    %v1861 = vpop.f32.mrb[0].mxu0
    %v1862 = vadd.f32 %v1767, %v1861
    %v1863 = vpop.f32.mrb[0].mxu0
    %1864 = vdwg.mxu0
    %1865 = vmatprep.subr.mxu0 0.0
    %v1866 = vand.u32 %v1388, 4294901760
    %1867 = vmatpush1.msra.mxu0 %v1866
    %1868 = vmatprep.subr.mxu0 0.0
    %v1869 = vand.u32 %v1389, 4294901760
    %1870 = vmatpush1.msra.mxu0 %v1869
    %1871 = vmatprep.subr.mxu0 0.0
    %v1872 = vand.u32 %v1390, 4294901760
    %1873 = vmatpush1.msra.mxu0 %v1872
    %1874 = vmatprep.subr.mxu0 0.0
    %v1875 = vand.u32 %v1391, 4294901760
    %1876 = vmatpush1.msra.mxu0 %v1875
    %1877 = vmatprep.subr.mxu0 0.0
    %v1878 = vand.u32 %v1392, 4294901760
    %1879 = vmatpush1.msra.mxu0 %v1878
    %1880 = vmatprep.subr.mxu0 0.0
    %v1881 = vand.u32 %v1393, 4294901760
    %1882 = vmatpush1.msra.mxu0 %v1881
    %1883 = vmatprep.subr.mxu0 0.0
    %v1884 = vand.u32 %v1394, 4294901760
    %1885 = vmatpush1.msra.mxu0 %v1884
    %1886 = vmatprep.subr.mxu0 0.0
    %v1887 = vand.u32 %v1395, 4294901760
    %1888 = vmatpush1.msra.mxu0 %v1887
    %1889 = vmatprep.subr.mxu0 0.0
    %1890 = vmatpush1.msra.mxu0 0.0
    %1891 = vmatprep.subr.mxu0 0.0
    %1892 = vmatpush1.msra.mxu0 0.0
    %1893 = vmatprep.subr.mxu0 0.0
    %1894 = vmatpush1.msra.mxu0 0.0
    %1895 = vmatprep.subr.mxu0 0.0
    %1896 = vmatpush1.msra.mxu0 0.0
    %1897 = vmatprep.subr.mxu0 0.0
    %1898 = vmatpush1.msra.mxu0 0.0
    %1899 = vmatprep.subr.mxu0 0.0
    %1900 = vmatpush1.msra.mxu0 0.0
    %1901 = vmatprep.subr.mxu0 0.0
    %1902 = vmatpush1.msra.mxu0 0.0
    %1903 = vmatprep.subr.mxu0 0.0
    %1904 = vmatpush1.msra.mxu0 0.0
    %1905 = vmatprep.subr.mxu0 0.0
    %1906 = vmatpush1.msra.mxu0 0.0
    %1907 = vmatprep.subr.mxu0 0.0
    %1908 = vmatpush1.msra.mxu0 0.0
    %1909 = vmatprep.subr.mxu0 0.0
    %1910 = vmatpush1.msra.mxu0 0.0
    %1911 = vmatprep.subr.mxu0 0.0
    %1912 = vmatpush1.msra.mxu0 0.0
    %1913 = vmatprep.subr.mxu0 0.0
    %1914 = vmatpush1.msra.mxu0 0.0
    %1915 = vmatprep.subr.mxu0 0.0
    %1916 = vmatpush1.msra.mxu0 0.0
    %1917 = vmatprep.subr.mxu0 0.0
    %1918 = vmatpush1.msra.mxu0 0.0
    %1919 = vmatprep.subr.mxu0 0.0
    %1920 = vmatpush1.msra.mxu0 0.0
    %1921 = vmatprep.subr.mxu0 0.0
    %1922 = vmatpush1.msra.mxu0 0.0
    %1923 = vmatprep.subr.mxu0 0.0
    %1924 = vmatpush1.msra.mxu0 0.0
    %1925 = vmatprep.subr.mxu0 0.0
    %1926 = vmatpush1.msra.mxu0 0.0
    %1927 = vmatprep.subr.mxu0 0.0
    %1928 = vmatpush1.msra.mxu0 0.0
    %1929 = vmatprep.subr.mxu0 0.0
    %1930 = vmatpush1.msra.mxu0 0.0
    %1931 = vmatprep.subr.mxu0 0.0
    %1932 = vmatpush1.msra.mxu0 0.0
    %1933 = vmatprep.subr.mxu0 0.0
    %1934 = vmatpush1.msra.mxu0 0.0
    %1935 = vmatprep.subr.mxu0 0.0
    %1936 = vmatpush1.msra.mxu0 0.0
    %1937 = vmatprep.mubr.f32.mxu0 0.0
    %v1938 = vand.u32 %v1405, 4294901760
    %1939 = vmatmul.mubr.f32.gmra.mrb[0].mxu0 %v1938
    %v1940 = vpop.f32.mrb[0].mxu0
    %v1941 = vadd.f32 %v1862, %v1940
    %v1942 = vpop.f32.mrb[0].mxu0
    %1943 = vdwg.mxu0
    %v1944 = vmax.f32 %v1941, 0.0
    %v1945 = vld [vmem:[%s6] sm:$0xff]
    %v1946 = vld [vmem:[%s6 + $0x8] sm:$0xff]
    %v1947 = vld [vmem:[%s6 + $0x10] sm:$0xff]
    %v1948 = vld [vmem:[%s6 + $0x18] sm:$0xff]
    %v1949 = vld [vmem:[%s6 + $0x20] sm:$0xff]
    %v1950 = vld [vmem:[%s6 + $0x28] sm:$0xff]
    %v1951 = vld [vmem:[%s6 + $0x30] sm:$0xff]
    %v1952 = vld [vmem:[%s6 + $0x38] sm:$0xff]
    %v1953 = vld [vmem:[%s7] sm:$0x1]
    %v1955 = vlaneseq
    %v1956 = vshrl.u32 %v1955, 7
    %v1957 = vsub.s32 0, %v1956
    %v1958 = vrot.slane %v1953, %v1957
    %v1961 = vsel %vm1403, %v1944, 0
    %1963 = vmatprep.subr.mxu0 0.0
    %v1964 = vand.u32 %v1945, 4294901760
    %1965 = vmatpush1.msra.mxu0 %v1964
    %1966 = vmatprep.subr.mxu0 0.0
    %v1967 = vand.u32 %v1946, 4294901760
    %1968 = vmatpush1.msra.mxu0 %v1967
    %1969 = vmatprep.subr.mxu0 0.0
    %v1970 = vand.u32 %v1947, 4294901760
    %1971 = vmatpush1.msra.mxu0 %v1970
    %1972 = vmatprep.subr.mxu0 0.0
    %v1973 = vand.u32 %v1948, 4294901760
    %1974 = vmatpush1.msra.mxu0 %v1973
    %1975 = vmatprep.subr.mxu0 0.0
    %v1976 = vand.u32 %v1949, 4294901760
    %1977 = vmatpush1.msra.mxu0 %v1976
    %1978 = vmatprep.subr.mxu0 0.0
    %v1979 = vand.u32 %v1950, 4294901760
    %1980 = vmatpush1.msra.mxu0 %v1979
    %1981 = vmatprep.subr.mxu0 0.0
    %v1982 = vand.u32 %v1951, 4294901760
    %1983 = vmatpush1.msra.mxu0 %v1982
    %1984 = vmatprep.subr.mxu0 0.0
    %v1985 = vand.u32 %v1952, 4294901760
    %1986 = vmatpush1.msra.mxu0 %v1985
    %1987 = vmatprep.subr.mxu0 0.0
    %1988 = vmatpush1.msra.mxu0 0.0
    %1989 = vmatprep.subr.mxu0 0.0
    %1990 = vmatpush1.msra.mxu0 0.0
    %1991 = vmatprep.subr.mxu0 0.0
    %1992 = vmatpush1.msra.mxu0 0.0
    %1993 = vmatprep.subr.mxu0 0.0
    %1994 = vmatpush1.msra.mxu0 0.0
    %1995 = vmatprep.subr.mxu0 0.0
    %1996 = vmatpush1.msra.mxu0 0.0
    %1997 = vmatprep.subr.mxu0 0.0
    %1998 = vmatpush1.msra.mxu0 0.0
    %1999 = vmatprep.subr.mxu0 0.0
    %2000 = vmatpush1.msra.mxu0 0.0
    %2001 = vmatprep.subr.mxu0 0.0
    %2002 = vmatpush1.msra.mxu0 0.0
    %2003 = vmatprep.subr.mxu0 0.0
    %2004 = vmatpush1.msra.mxu0 0.0
    %2005 = vmatprep.subr.mxu0 0.0
    %2006 = vmatpush1.msra.mxu0 0.0
    %2007 = vmatprep.subr.mxu0 0.0
    %2008 = vmatpush1.msra.mxu0 0.0
    %2009 = vmatprep.subr.mxu0 0.0
    %2010 = vmatpush1.msra.mxu0 0.0
    %2011 = vmatprep.subr.mxu0 0.0
    %2012 = vmatpush1.msra.mxu0 0.0
    %2013 = vmatprep.subr.mxu0 0.0
    %2014 = vmatpush1.msra.mxu0 0.0
    %2015 = vmatprep.subr.mxu0 0.0
    %2016 = vmatpush1.msra.mxu0 0.0
    %2017 = vmatprep.subr.mxu0 0.0
    %2018 = vmatpush1.msra.mxu0 0.0
    %2019 = vmatprep.subr.mxu0 0.0
    %2020 = vmatpush1.msra.mxu0 0.0
    %2021 = vmatprep.subr.mxu0 0.0
    %2022 = vmatpush1.msra.mxu0 0.0
    %2023 = vmatprep.subr.mxu0 0.0
    %2024 = vmatpush1.msra.mxu0 0.0
    %2025 = vmatprep.subr.mxu0 0.0
    %2026 = vmatpush1.msra.mxu0 0.0
    %2027 = vmatprep.subr.mxu0 0.0
    %2028 = vmatpush1.msra.mxu0 0.0
    %2029 = vmatprep.subr.mxu0 0.0
    %2030 = vmatpush1.msra.mxu0 0.0
    %2031 = vmatprep.subr.mxu0 0.0
    %2032 = vmatpush1.msra.mxu0 0.0
    %2033 = vmatprep.subr.mxu0 0.0
    %2034 = vmatpush1.msra.mxu0 0.0
    %2035 = vmatprep.mubr.f32.mxu0 0.0
    %v2036 = vand.u32 %v1961, 4294901760
    %v2037 = vsub.f32 %v1961, %v2036
    %v2038 = vand.u32 %v2037, 4294901760
    %v2039 = vsub.f32 %v2037, %v2038
    %v2040 = vand.u32 %v2039, 4294901760
    %2041 = vmatmul.mubr.f32.gmra.mrb[0].mxu0 %v2040
    %v2042 = vpop.f32.mrb[0].mxu0
    %v2043 = vadd.f32 %v1958, %v2042
    %v2044 = vpop.f32.mrb[0].mxu0
    %2045 = vdwg.mxu0
    %2046 = vmatprep.subr.mxu0 0.0
    %v2047 = vand.u32 %v1945, 4294901760
    %v2048 = vsub.f32 %v1945, %v2047
    %v2049 = vand.u32 %v2048, 4294901760
    %v2050 = vsub.f32 %v2048, %v2049
    %v2051 = vand.u32 %v2050, 4294901760
    %2052 = vmatpush1.msra.mxu0 %v2051
    %2053 = vmatprep.subr.mxu0 0.0
    %v2054 = vand.u32 %v1946, 4294901760
    %v2055 = vsub.f32 %v1946, %v2054
    %v2056 = vand.u32 %v2055, 4294901760
    %v2057 = vsub.f32 %v2055, %v2056
    %v2058 = vand.u32 %v2057, 4294901760
    %2059 = vmatpush1.msra.mxu0 %v2058
    %2060 = vmatprep.subr.mxu0 0.0
    %v2061 = vand.u32 %v1947, 4294901760
    %v2062 = vsub.f32 %v1947, %v2061
    %v2063 = vand.u32 %v2062, 4294901760
    %v2064 = vsub.f32 %v2062, %v2063
    %v2065 = vand.u32 %v2064, 4294901760
    %2066 = vmatpush1.msra.mxu0 %v2065
    %2067 = vmatprep.subr.mxu0 0.0
    %v2068 = vand.u32 %v1948, 4294901760
    %v2069 = vsub.f32 %v1948, %v2068
    %v2070 = vand.u32 %v2069, 4294901760
    %v2071 = vsub.f32 %v2069, %v2070
    %v2072 = vand.u32 %v2071, 4294901760
    %2073 = vmatpush1.msra.mxu0 %v2072
    %2074 = vmatprep.subr.mxu0 0.0
    %v2075 = vand.u32 %v1949, 4294901760
    %v2076 = vsub.f32 %v1949, %v2075
    %v2077 = vand.u32 %v2076, 4294901760
    %v2078 = vsub.f32 %v2076, %v2077
    %v2079 = vand.u32 %v2078, 4294901760
    %2080 = vmatpush1.msra.mxu0 %v2079
    %2081 = vmatprep.subr.mxu0 0.0
    %v2082 = vand.u32 %v1950, 4294901760
    %v2083 = vsub.f32 %v1950, %v2082
    %v2084 = vand.u32 %v2083, 4294901760
    %v2085 = vsub.f32 %v2083, %v2084
    %v2086 = vand.u32 %v2085, 4294901760
    %2087 = vmatpush1.msra.mxu0 %v2086
    %2088 = vmatprep.subr.mxu0 0.0
    %v2089 = vand.u32 %v1951, 4294901760
    %v2090 = vsub.f32 %v1951, %v2089
    %v2091 = vand.u32 %v2090, 4294901760
    %v2092 = vsub.f32 %v2090, %v2091
    %v2093 = vand.u32 %v2092, 4294901760
    %2094 = vmatpush1.msra.mxu0 %v2093
    %2095 = vmatprep.subr.mxu0 0.0
    %v2096 = vand.u32 %v1952, 4294901760
    %v2097 = vsub.f32 %v1952, %v2096
    %v2098 = vand.u32 %v2097, 4294901760
    %v2099 = vsub.f32 %v2097, %v2098
    %v2100 = vand.u32 %v2099, 4294901760
    %2101 = vmatpush1.msra.mxu0 %v2100
    %2102 = vmatprep.subr.mxu0 0.0
    %2103 = vmatpush1.msra.mxu0 0.0
    %2104 = vmatprep.subr.mxu0 0.0
    %2105 = vmatpush1.msra.mxu0 0.0
    %2106 = vmatprep.subr.mxu0 0.0
    %2107 = vmatpush1.msra.mxu0 0.0
    %2108 = vmatprep.subr.mxu0 0.0
    %2109 = vmatpush1.msra.mxu0 0.0
    %2110 = vmatprep.subr.mxu0 0.0
    %2111 = vmatpush1.msra.mxu0 0.0
    %2112 = vmatprep.subr.mxu0 0.0
    %2113 = vmatpush1.msra.mxu0 0.0
    %2114 = vmatprep.subr.mxu0 0.0
    %2115 = vmatpush1.msra.mxu0 0.0
    %2116 = vmatprep.subr.mxu0 0.0
    %2117 = vmatpush1.msra.mxu0 0.0
    %2118 = vmatprep.subr.mxu0 0.0
    %2119 = vmatpush1.msra.mxu0 0.0
    %2120 = vmatprep.subr.mxu0 0.0
    %2121 = vmatpush1.msra.mxu0 0.0
    %2122 = vmatprep.subr.mxu0 0.0
    %2123 = vmatpush1.msra.mxu0 0.0
    %2124 = vmatprep.subr.mxu0 0.0
    %2125 = vmatpush1.msra.mxu0 0.0
    %2126 = vmatprep.subr.mxu0 0.0
    %2127 = vmatpush1.msra.mxu0 0.0
    %2128 = vmatprep.subr.mxu0 0.0
    %2129 = vmatpush1.msra.mxu0 0.0
    %2130 = vmatprep.subr.mxu0 0.0
    %2131 = vmatpush1.msra.mxu0 0.0
    %2132 = vmatprep.subr.mxu0 0.0
    %2133 = vmatpush1.msra.mxu0 0.0
    %2134 = vmatprep.subr.mxu0 0.0
    %2135 = vmatpush1.msra.mxu0 0.0
    %2136 = vmatprep.subr.mxu0 0.0
    %2137 = vmatpush1.msra.mxu0 0.0
    %2138 = vmatprep.subr.mxu0 0.0
    %2139 = vmatpush1.msra.mxu0 0.0
    %2140 = vmatprep.subr.mxu0 0.0
    %2141 = vmatpush1.msra.mxu0 0.0
    %2142 = vmatprep.subr.mxu0 0.0
    %2143 = vmatpush1.msra.mxu0 0.0
    %2144 = vmatprep.subr.mxu0 0.0
    %2145 = vmatpush1.msra.mxu0 0.0
    %2146 = vmatprep.subr.mxu0 0.0
    %2147 = vmatpush1.msra.mxu0 0.0
    %2148 = vmatprep.subr.mxu0 0.0
    %2149 = vmatpush1.msra.mxu0 0.0
    %2150 = vmatprep.mubr.f32.mxu0 0.0
    %v2151 = vand.u32 %v1961, 4294901760
    %2152 = vmatmul.mubr.f32.gmra.mrb[0].mxu0 %v2151
    %v2153 = vpop.f32.mrb[0].mxu0
    %v2154 = vadd.f32 %v2043, %v2153
    %v2155 = vpop.f32.mrb[0].mxu0
    %2156 = vdwg.mxu0
    %2157 = vmatprep.subr.mxu0 0.0
    %v2158 = vand.u32 %v1945, 4294901760
    %v2159 = vsub.f32 %v1945, %v2158
    %2160 = vmatpush1.msra.mxu0 %v2159
    %2161 = vmatprep.subr.mxu0 0.0
    %v2162 = vand.u32 %v1946, 4294901760
    %v2163 = vsub.f32 %v1946, %v2162
    %2164 = vmatpush1.msra.mxu0 %v2163
    %2165 = vmatprep.subr.mxu0 0.0
    %v2166 = vand.u32 %v1947, 4294901760
    %v2167 = vsub.f32 %v1947, %v2166
    %2168 = vmatpush1.msra.mxu0 %v2167
    %2169 = vmatprep.subr.mxu0 0.0
    %v2170 = vand.u32 %v1948, 4294901760
    %v2171 = vsub.f32 %v1948, %v2170
    %2172 = vmatpush1.msra.mxu0 %v2171
    %2173 = vmatprep.subr.mxu0 0.0
    %v2174 = vand.u32 %v1949, 4294901760
    %v2175 = vsub.f32 %v1949, %v2174
    %2176 = vmatpush1.msra.mxu0 %v2175
    %2177 = vmatprep.subr.mxu0 0.0
    %v2178 = vand.u32 %v1950, 4294901760
    %v2179 = vsub.f32 %v1950, %v2178
    %2180 = vmatpush1.msra.mxu0 %v2179
    %2181 = vmatprep.subr.mxu0 0.0
    %v2182 = vand.u32 %v1951, 4294901760
    %v2183 = vsub.f32 %v1951, %v2182
    %2184 = vmatpush1.msra.mxu0 %v2183
    %2185 = vmatprep.subr.mxu0 0.0
    %v2186 = vand.u32 %v1952, 4294901760
    %v2187 = vsub.f32 %v1952, %v2186
    %2188 = vmatpush1.msra.mxu0 %v2187
    %2189 = vmatprep.subr.mxu0 0.0
    %2190 = vmatpush1.msra.mxu0 0.0
    %2191 = vmatprep.subr.mxu0 0.0
    %2192 = vmatpush1.msra.mxu0 0.0
    %2193 = vmatprep.subr.mxu0 0.0
    %2194 = vmatpush1.msra.mxu0 0.0
    %2195 = vmatprep.subr.mxu0 0.0
    %2196 = vmatpush1.msra.mxu0 0.0
    %2197 = vmatprep.subr.mxu0 0.0
    %2198 = vmatpush1.msra.mxu0 0.0
    %2199 = vmatprep.subr.mxu0 0.0
    %2200 = vmatpush1.msra.mxu0 0.0
    %2201 = vmatprep.subr.mxu0 0.0
    %2202 = vmatpush1.msra.mxu0 0.0
    %2203 = vmatprep.subr.mxu0 0.0
    %2204 = vmatpush1.msra.mxu0 0.0
    %2205 = vmatprep.subr.mxu0 0.0
    %2206 = vmatpush1.msra.mxu0 0.0
    %2207 = vmatprep.subr.mxu0 0.0
    %2208 = vmatpush1.msra.mxu0 0.0
    %2209 = vmatprep.subr.mxu0 0.0
    %2210 = vmatpush1.msra.mxu0 0.0
    %2211 = vmatprep.subr.mxu0 0.0
    %2212 = vmatpush1.msra.mxu0 0.0
    %2213 = vmatprep.subr.mxu0 0.0
    %2214 = vmatpush1.msra.mxu0 0.0
    %2215 = vmatprep.subr.mxu0 0.0
    %2216 = vmatpush1.msra.mxu0 0.0
    %2217 = vmatprep.subr.mxu0 0.0
    %2218 = vmatpush1.msra.mxu0 0.0
    %2219 = vmatprep.subr.mxu0 0.0
    %2220 = vmatpush1.msra.mxu0 0.0
    %2221 = vmatprep.subr.mxu0 0.0
    %2222 = vmatpush1.msra.mxu0 0.0
    %2223 = vmatprep.subr.mxu0 0.0
    %2224 = vmatpush1.msra.mxu0 0.0
    %2225 = vmatprep.subr.mxu0 0.0
    %2226 = vmatpush1.msra.mxu0 0.0
    %2227 = vmatprep.subr.mxu0 0.0
    %2228 = vmatpush1.msra.mxu0 0.0
    %2229 = vmatprep.subr.mxu0 0.0
    %2230 = vmatpush1.msra.mxu0 0.0
    %2231 = vmatprep.subr.mxu0 0.0
    %2232 = vmatpush1.msra.mxu0 0.0
    %2233 = vmatprep.subr.mxu0 0.0
    %2234 = vmatpush1.msra.mxu0 0.0
    %2235 = vmatprep.subr.mxu0 0.0
    %2236 = vmatpush1.msra.mxu0 0.0
    %2237 = vmatprep.mubr.f32.mxu0 0.0
    %v2238 = vand.u32 %v1961, 4294901760
    %v2239 = vsub.f32 %v1961, %v2238
    %2240 = vmatmul.mubr.f32.gmra.mrb[0].mxu0 %v2239
    %v2241 = vpop.f32.mrb[0].mxu0
    %v2242 = vadd.f32 %v2154, %v2241
    %v2243 = vpop.f32.mrb[0].mxu0
    %2244 = vdwg.mxu0
    %2245 = vmatprep.subr.mxu0 0.0
    %v2246 = vand.u32 %v1945, 4294901760
    %2247 = vmatpush1.msra.mxu0 %v2246
    %2248 = vmatprep.subr.mxu0 0.0
    %v2249 = vand.u32 %v1946, 4294901760
    %2250 = vmatpush1.msra.mxu0 %v2249
    %2251 = vmatprep.subr.mxu0 0.0
    %v2252 = vand.u32 %v1947, 4294901760
    %2253 = vmatpush1.msra.mxu0 %v2252
    %2254 = vmatprep.subr.mxu0 0.0
    %v2255 = vand.u32 %v1948, 4294901760
    %2256 = vmatpush1.msra.mxu0 %v2255
    %2257 = vmatprep.subr.mxu0 0.0
    %v2258 = vand.u32 %v1949, 4294901760
    %2259 = vmatpush1.msra.mxu0 %v2258
    %2260 = vmatprep.subr.mxu0 0.0
    %v2261 = vand.u32 %v1950, 4294901760
    %2262 = vmatpush1.msra.mxu0 %v2261
    %2263 = vmatprep.subr.mxu0 0.0
    %v2264 = vand.u32 %v1951, 4294901760
    %2265 = vmatpush1.msra.mxu0 %v2264
    %2266 = vmatprep.subr.mxu0 0.0
    %v2267 = vand.u32 %v1952, 4294901760
    %2268 = vmatpush1.msra.mxu0 %v2267
    %2269 = vmatprep.subr.mxu0 0.0
    %2270 = vmatpush1.msra.mxu0 0.0
    %2271 = vmatprep.subr.mxu0 0.0
    %2272 = vmatpush1.msra.mxu0 0.0
    %2273 = vmatprep.subr.mxu0 0.0
    %2274 = vmatpush1.msra.mxu0 0.0
    %2275 = vmatprep.subr.mxu0 0.0
    %2276 = vmatpush1.msra.mxu0 0.0
    %2277 = vmatprep.subr.mxu0 0.0
    %2278 = vmatpush1.msra.mxu0 0.0
    %2279 = vmatprep.subr.mxu0 0.0
    %2280 = vmatpush1.msra.mxu0 0.0
    %2281 = vmatprep.subr.mxu0 0.0
    %2282 = vmatpush1.msra.mxu0 0.0
    %2283 = vmatprep.subr.mxu0 0.0
    %2284 = vmatpush1.msra.mxu0 0.0
    %2285 = vmatprep.subr.mxu0 0.0
    %2286 = vmatpush1.msra.mxu0 0.0
    %2287 = vmatprep.subr.mxu0 0.0
    %2288 = vmatpush1.msra.mxu0 0.0
    %2289 = vmatprep.subr.mxu0 0.0
    %2290 = vmatpush1.msra.mxu0 0.0
    %2291 = vmatprep.subr.mxu0 0.0
    %2292 = vmatpush1.msra.mxu0 0.0
    %2293 = vmatprep.subr.mxu0 0.0
    %2294 = vmatpush1.msra.mxu0 0.0
    %2295 = vmatprep.subr.mxu0 0.0
    %2296 = vmatpush1.msra.mxu0 0.0
    %2297 = vmatprep.subr.mxu0 0.0
    %2298 = vmatpush1.msra.mxu0 0.0
    %2299 = vmatprep.subr.mxu0 0.0
    %2300 = vmatpush1.msra.mxu0 0.0
    %2301 = vmatprep.subr.mxu0 0.0
    %2302 = vmatpush1.msra.mxu0 0.0
    %2303 = vmatprep.subr.mxu0 0.0
    %2304 = vmatpush1.msra.mxu0 0.0
    %2305 = vmatprep.subr.mxu0 0.0
    %2306 = vmatpush1.msra.mxu0 0.0
    %2307 = vmatprep.subr.mxu0 0.0
    %2308 = vmatpush1.msra.mxu0 0.0
    %2309 = vmatprep.subr.mxu0 0.0
    %2310 = vmatpush1.msra.mxu0 0.0
    %2311 = vmatprep.subr.mxu0 0.0
    %2312 = vmatpush1.msra.mxu0 0.0
    %2313 = vmatprep.subr.mxu0 0.0
    %2314 = vmatpush1.msra.mxu0 0.0
    %2315 = vmatprep.subr.mxu0 0.0
    %2316 = vmatpush1.msra.mxu0 0.0
    %2317 = vmatprep.mubr.f32.mxu0 0.0
    %v2318 = vand.u32 %v1961, 4294901760
    %v2319 = vsub.f32 %v1961, %v2318
    %v2320 = vand.u32 %v2319, 4294901760
    %2321 = vmatmul.mubr.f32.gmra.mrb[0].mxu0 %v2320
    %v2322 = vpop.f32.mrb[0].mxu0
    %v2323 = vadd.f32 %v2242, %v2322
    %v2324 = vpop.f32.mrb[0].mxu0
    %2325 = vdwg.mxu0
    %2326 = vmatprep.subr.mxu0 0.0
    %v2327 = vand.u32 %v1945, 4294901760
    %v2328 = vsub.f32 %v1945, %v2327
    %v2329 = vand.u32 %v2328, 4294901760
    %2330 = vmatpush1.msra.mxu0 %v2329
    %2331 = vmatprep.subr.mxu0 0.0
    %v2332 = vand.u32 %v1946, 4294901760
    %v2333 = vsub.f32 %v1946, %v2332
    %v2334 = vand.u32 %v2333, 4294901760
    %2335 = vmatpush1.msra.mxu0 %v2334
    %2336 = vmatprep.subr.mxu0 0.0
    %v2337 = vand.u32 %v1947, 4294901760
    %v2338 = vsub.f32 %v1947, %v2337
    %v2339 = vand.u32 %v2338, 4294901760
    %2340 = vmatpush1.msra.mxu0 %v2339
    %2341 = vmatprep.subr.mxu0 0.0
    %v2342 = vand.u32 %v1948, 4294901760
    %v2343 = vsub.f32 %v1948, %v2342
    %v2344 = vand.u32 %v2343, 4294901760
    %2345 = vmatpush1.msra.mxu0 %v2344
    %2346 = vmatprep.subr.mxu0 0.0
    %v2347 = vand.u32 %v1949, 4294901760
    %v2348 = vsub.f32 %v1949, %v2347
    %v2349 = vand.u32 %v2348, 4294901760
    %2350 = vmatpush1.msra.mxu0 %v2349
    %2351 = vmatprep.subr.mxu0 0.0
    %v2352 = vand.u32 %v1950, 4294901760
    %v2353 = vsub.f32 %v1950, %v2352
    %v2354 = vand.u32 %v2353, 4294901760
    %2355 = vmatpush1.msra.mxu0 %v2354
    %2356 = vmatprep.subr.mxu0 0.0
    %v2357 = vand.u32 %v1951, 4294901760
    %v2358 = vsub.f32 %v1951, %v2357
    %v2359 = vand.u32 %v2358, 4294901760
    %2360 = vmatpush1.msra.mxu0 %v2359
    %2361 = vmatprep.subr.mxu0 0.0
    %v2362 = vand.u32 %v1952, 4294901760
    %v2363 = vsub.f32 %v1952, %v2362
    %v2364 = vand.u32 %v2363, 4294901760
    %2365 = vmatpush1.msra.mxu0 %v2364
    %2366 = vmatprep.subr.mxu0 0.0
    %2367 = vmatpush1.msra.mxu0 0.0
    %2368 = vmatprep.subr.mxu0 0.0
    %2369 = vmatpush1.msra.mxu0 0.0
    %2370 = vmatprep.subr.mxu0 0.0
    %2371 = vmatpush1.msra.mxu0 0.0
    %2372 = vmatprep.subr.mxu0 0.0
    %2373 = vmatpush1.msra.mxu0 0.0
    %2374 = vmatprep.subr.mxu0 0.0
    %2375 = vmatpush1.msra.mxu0 0.0
    %2376 = vmatprep.subr.mxu0 0.0
    %2377 = vmatpush1.msra.mxu0 0.0
    %2378 = vmatprep.subr.mxu0 0.0
    %2379 = vmatpush1.msra.mxu0 0.0
    %2380 = vmatprep.subr.mxu0 0.0
    %2381 = vmatpush1.msra.mxu0 0.0
    %2382 = vmatprep.subr.mxu0 0.0
    %2383 = vmatpush1.msra.mxu0 0.0
    %2384 = vmatprep.subr.mxu0 0.0
    %2385 = vmatpush1.msra.mxu0 0.0
    %2386 = vmatprep.subr.mxu0 0.0
    %2387 = vmatpush1.msra.mxu0 0.0
    %2388 = vmatprep.subr.mxu0 0.0
    %2389 = vmatpush1.msra.mxu0 0.0
    %2390 = vmatprep.subr.mxu0 0.0
    %2391 = vmatpush1.msra.mxu0 0.0
    %2392 = vmatprep.subr.mxu0 0.0
    %2393 = vmatpush1.msra.mxu0 0.0
    %2394 = vmatprep.subr.mxu0 0.0
    %2395 = vmatpush1.msra.mxu0 0.0
    %2396 = vmatprep.subr.mxu0 0.0
    %2397 = vmatpush1.msra.mxu0 0.0
    %2398 = vmatprep.subr.mxu0 0.0
    %2399 = vmatpush1.msra.mxu0 0.0
    %2400 = vmatprep.subr.mxu0 0.0
    %2401 = vmatpush1.msra.mxu0 0.0
    %2402 = vmatprep.subr.mxu0 0.0
    %2403 = vmatpush1.msra.mxu0 0.0
    %2404 = vmatprep.subr.mxu0 0.0
    %2405 = vmatpush1.msra.mxu0 0.0
    %2406 = vmatprep.subr.mxu0 0.0
    %2407 = vmatpush1.msra.mxu0 0.0
    %2408 = vmatprep.subr.mxu0 0.0
    %2409 = vmatpush1.msra.mxu0 0.0
    %2410 = vmatprep.subr.mxu0 0.0
    %2411 = vmatpush1.msra.mxu0 0.0
    %2412 = vmatprep.subr.mxu0 0.0
    %2413 = vmatpush1.msra.mxu0 0.0
    %2414 = vmatprep.mubr.f32.mxu0 0.0
    %v2415 = vand.u32 %v1961, 4294901760
    %2416 = vmatmul.mubr.f32.gmra.mrb[0].mxu0 %v2415
    %v2417 = vpop.f32.mrb[0].mxu0
    %v2418 = vadd.f32 %v2323, %v2417
    %v2419 = vpop.f32.mrb[0].mxu0
    %2420 = vdwg.mxu0
    %2421 = vmatprep.subr.mxu0 0.0
    %v2422 = vand.u32 %v1945, 4294901760
    %2423 = vmatpush1.msra.mxu0 %v2422
    %2424 = vmatprep.subr.mxu0 0.0
    %v2425 = vand.u32 %v1946, 4294901760
    %2426 = vmatpush1.msra.mxu0 %v2425
    %2427 = vmatprep.subr.mxu0 0.0
    %v2428 = vand.u32 %v1947, 4294901760
    %2429 = vmatpush1.msra.mxu0 %v2428
    %2430 = vmatprep.subr.mxu0 0.0
    %v2431 = vand.u32 %v1948, 4294901760
    %2432 = vmatpush1.msra.mxu0 %v2431
    %2433 = vmatprep.subr.mxu0 0.0
    %v2434 = vand.u32 %v1949, 4294901760
    %2435 = vmatpush1.msra.mxu0 %v2434
    %2436 = vmatprep.subr.mxu0 0.0
    %v2437 = vand.u32 %v1950, 4294901760
    %2438 = vmatpush1.msra.mxu0 %v2437
    %2439 = vmatprep.subr.mxu0 0.0
    %v2440 = vand.u32 %v1951, 4294901760
    %2441 = vmatpush1.msra.mxu0 %v2440
    %2442 = vmatprep.subr.mxu0 0.0
    %v2443 = vand.u32 %v1952, 4294901760
    %2444 = vmatpush1.msra.mxu0 %v2443
    %2445 = vmatprep.subr.mxu0 0.0
    %2446 = vmatpush1.msra.mxu0 0.0
    %2447 = vmatprep.subr.mxu0 0.0
    %2448 = vmatpush1.msra.mxu0 0.0
    %2449 = vmatprep.subr.mxu0 0.0
    %2450 = vmatpush1.msra.mxu0 0.0
    %2451 = vmatprep.subr.mxu0 0.0
    %2452 = vmatpush1.msra.mxu0 0.0
    %2453 = vmatprep.subr.mxu0 0.0
    %2454 = vmatpush1.msra.mxu0 0.0
    %2455 = vmatprep.subr.mxu0 0.0
    %2456 = vmatpush1.msra.mxu0 0.0
    %2457 = vmatprep.subr.mxu0 0.0
    %2458 = vmatpush1.msra.mxu0 0.0
    %2459 = vmatprep.subr.mxu0 0.0
    %2460 = vmatpush1.msra.mxu0 0.0
    %2461 = vmatprep.subr.mxu0 0.0
    %2462 = vmatpush1.msra.mxu0 0.0
    %2463 = vmatprep.subr.mxu0 0.0
    %2464 = vmatpush1.msra.mxu0 0.0
    %2465 = vmatprep.subr.mxu0 0.0
    %2466 = vmatpush1.msra.mxu0 0.0
    %2467 = vmatprep.subr.mxu0 0.0
    %2468 = vmatpush1.msra.mxu0 0.0
    %2469 = vmatprep.subr.mxu0 0.0
    %2470 = vmatpush1.msra.mxu0 0.0
    %2471 = vmatprep.subr.mxu0 0.0
    %2472 = vmatpush1.msra.mxu0 0.0
    %2473 = vmatprep.subr.mxu0 0.0
    %2474 = vmatpush1.msra.mxu0 0.0
    %2475 = vmatprep.subr.mxu0 0.0
    %2476 = vmatpush1.msra.mxu0 0.0
    %2477 = vmatprep.subr.mxu0 0.0
    %2478 = vmatpush1.msra.mxu0 0.0
    %2479 = vmatprep.subr.mxu0 0.0
    %2480 = vmatpush1.msra.mxu0 0.0
    %2481 = vmatprep.subr.mxu0 0.0
    %2482 = vmatpush1.msra.mxu0 0.0
    %2483 = vmatprep.subr.mxu0 0.0
    %2484 = vmatpush1.msra.mxu0 0.0
    %2485 = vmatprep.subr.mxu0 0.0
    %2486 = vmatpush1.msra.mxu0 0.0
    %2487 = vmatprep.subr.mxu0 0.0
    %2488 = vmatpush1.msra.mxu0 0.0
    %2489 = vmatprep.subr.mxu0 0.0
    %2490 = vmatpush1.msra.mxu0 0.0
    %2491 = vmatprep.subr.mxu0 0.0
    %2492 = vmatpush1.msra.mxu0 0.0
    %2493 = vmatprep.mubr.f32.mxu0 0.0
    %v2494 = vand.u32 %v1961, 4294901760
    %2495 = vmatmul.mubr.f32.gmra.mrb[0].mxu0 %v2494
    %v2496 = vpop.f32.mrb[0].mxu0
    %v2497 = vadd.f32 %v2418, %v2496
    %v2498 = vpop.f32.mrb[0].mxu0
    %2499 = vdwg.mxu0
    %vm2500 = vcmask 261120
    %2501 = vst.msk [vmem:[#allocation7] sm:$0xff] %vm2500, %v2497
    // Predicated region
    $region42: #{tpu_custom_call.1} parent=1 // pred_check
      _
    $region43: #{tpu_custom_call.1} parent=1 // pred_check_branch
      %2503 = sbr.rel (0) target = $region45
    $region44: #{tpu_custom_call.1} parent=1 // pred_region
      %s2505 = ssub.s32 128, 128
      %2506 = vsyncadd [#allocation4], %s2505
      %s2508 = sshll.u32 [#allocation7], 4
      %s2509 = int_to_ptr.vmem [resolvable:$true] %s2508
      %2511 = dma.vmem_to_hbm [thread:$0]  %s2509, 128, %s8, [#allocation4]
    $region45: #{tpu_custom_call.1} parent=1 // pred_fallthru
      _
    // Predicated region
    $region46: #{tpu_custom_call.1} parent=1 // pred_check
      _
    $region47: #{tpu_custom_call.1} parent=1 // pred_check_branch
      %2513 = sbr.rel (0) target = $region49
    $region48: #{tpu_custom_call.1} parent=1 // pred_region
      %2514 = dma.done [#allocation4], 128
    $region49: #{tpu_custom_call.1} parent=1 // pred_fallthru
      _
    %2515 = vsyncpa [#allocation3], 1
    %2516 = vsyncpa [#allocation6], 1
    %2517 = vsyncpa [#allocation4], 1

</llo_original>
